<compile_context>
chip_gen: v5e
topology: v5e:2x2
jax: 0.10.0
libtpu: 0.0.40
codegen_flags: <defaults>
</compile_context>

<pallas_src>
import functools
import math

import jax
import jax.numpy as jnp
from jax import lax
from jax.experimental import pallas as pl
from jax.experimental.pallas import tpu as pltpu

IN_DIM = 1024
HID_DIM = 512
OUT_DIM = 1

_INV_SQRT2 = 1.0 / math.sqrt(2.0)
_SQRT_2_OVER_PI = math.sqrt(2.0 / math.pi)


def value_head_kernel(x_ref, w1_ref, b1_ref, w2_ref, b2_ref, o_ref, *,
                      gelu, precision):
    # Linear1 on the MXU; f32 accumulation regardless of operand dtype.
    h = jnp.dot(x_ref[...], w1_ref[...],
                preferred_element_type=jnp.float32, precision=precision)
    h = h + b1_ref[...].astype(jnp.float32)                     # (bb, 512)

    if gelu == "tanh":
        # tanh approximation -> EUP slot (otherwise-idle unit); frees the VALU.
        inner = _SQRT_2_OVER_PI * (h + 0.044715 * h * h * h)
        h = 0.5 * h * (1.0 + jnp.tanh(inner))
    else:
        # exact erf GELU -- matches torch.nn.functional.gelu default.
        h = 0.5 * h * (1.0 + lax.erf(h * _INV_SQRT2))

    # Linear2 (512 -> 1) as a VPU multiply + lane reduction; an N=1 MXU matmul
    # would waste MXU columns and force a drain between two matmuls.
    v = jnp.sum(h * w2_ref[...].astype(jnp.float32), axis=-1)   # (bb,)
    v = v + b2_ref[0, 0]                                        # SMEM scalar

    # lane-dense store: output tile is (1, bb) -> unmasked vector stores.
    o_ref[...] = v.reshape(1, -1).astype(o_ref.dtype)


def _round_up(n, m):
    return ((n + m - 1) // m) * m


def _has_two_tensorcores():
    """Best-effort v7x detection (2 TensorCores / 64 MiB VMEM per TC)."""
    try:
        kind = jax.devices()[0].device_kind.lower()
    except Exception:
        return False
    return ("v7" in kind) or ("7x" in kind)


def _choose_block_b(batch, two_cores, row_align):
    """Batch-tile policy.

    v7x (2 TCs): split into >=2 tiles of >=128 rows whenever the batch allows
    so both cores do work; cap at 1024 rows to stay well inside 64 MiB VMEM.
    v5e/v6e (1 TC): one big tile (up to 2048 rows) -- extra grid steps only
    add per-step overhead on a single core.
    """
    b_al = _round_up(max(batch, 1), row_align)
    if two_cores:
        if b_al >= 256:
            return min(1024, _round_up(pl.cdiv(b_al, 2), 128))
        return b_al
    return min(b_al, 2048)


def value_head(x, w1, b1, w2, b2, *, block_b=None, matmul_dtype=jnp.bfloat16,
               gelu="exact", mxu_precision=None):
    """x: (B, 1024); w1: (1024, 512); b1: (1, 512); w2: (512, 1); b2: (1, 1).

    matmul_dtype: dtype for the Linear1 MXU operands (default bf16 -- same MXU
    math as the f32-operand DEFAULT-precision path, half the memory traffic).
    gelu: "exact" (torch default, erf on the VPU) or "tanh" (EUP slot).
    mxu_precision: pass lax.Precision.HIGHEST (with matmul_dtype=None) for
    true f32 MXU accuracy at ~3-6x MXU cost.
    """
    B, D = x.shape
    assert D == IN_DIM, f"expected feature dim {IN_DIM}, got {D}"

    use_bf16 = matmul_dtype is not None and jnp.dtype(matmul_dtype) == jnp.dtype(jnp.bfloat16)
    row_align = 16 if use_bf16 else 8

    two_cores = _has_two_tensorcores()
    bb = block_b if block_b is not None else _choose_block_b(B, two_cores, row_align)
    bb = _round_up(bb, row_align)

    grid = pl.cdiv(B, bb)
    n_pad = grid * bb   # lane-dense output width; tail rows are OOB reads,
                        # discarded below (no fp traps on TPU).

    x_in = x
    w1_in = w1
    if matmul_dtype is not None:
        x_in = x_in.astype(matmul_dtype)
        w1_in = w1.astype(matmul_dtype)

    b1_row = b1.reshape(1, HID_DIM).astype(jnp.float32)
    w2_row = w2.reshape(1, HID_DIM).astype(jnp.float32)   # row layout for VPU reduce
    b2_sc = b2.reshape(1, 1).astype(jnp.float32)          # scalar -> SMEM

    x_item = jnp.dtype(x_in.dtype).itemsize
    w1_item = jnp.dtype(w1_in.dtype).itemsize
    cost = pl.CostEstimate(
        flops=2 * n_pad * IN_DIM * HID_DIM + 6 * n_pad * HID_DIM,
        transcendentals=(n_pad * HID_DIM) if gelu == "tanh" else 0,
        bytes_accessed=(n_pad * IN_DIM * x_item
                        + IN_DIM * HID_DIM * w1_item
                        + (2 * HID_DIM + 1) * 4
                        + n_pad * 4),
    )

    vmem_limit = (48 if two_cores else 64) * 1024 * 1024

    kernel = functools.partial(value_head_kernel, gelu=gelu, precision=mxu_precision)

    out = pl.pallas_call(
        kernel,
        out_shape=jax.ShapeDtypeStruct((1, n_pad), jnp.float32),
        grid_spec=pltpu.PrefetchScalarGridSpec(
            num_scalar_prefetch=0,
            grid=(grid,),
            in_specs=[
                pl.BlockSpec((bb, IN_DIM), lambda i: (i, 0)),        # x tile
                pl.BlockSpec((IN_DIM, HID_DIM), lambda i: (0, 0)),   # w1 (resident)
                pl.BlockSpec((1, HID_DIM), lambda i: (0, 0)),        # b1 row
                pl.BlockSpec((1, HID_DIM), lambda i: (0, 0)),        # w2 as row
                pl.BlockSpec(memory_space=pltpu.SMEM),               # b2 scalar
            ],
            out_specs=pl.BlockSpec((1, bb), lambda i: (0, i)),       # lane-dense
        ),
        compiler_params=pltpu.CompilerParams(
            dimension_semantics=("parallel",),
            vmem_limit_bytes=vmem_limit,
        ),
        cost_estimate=cost,
    )(x_in, w1_in, b1_row, w2_row, b2_sc)

    # back to the (B, 1) shape of the torch module (drop OOB tail rows)
    return out.reshape(n_pad)[:B].reshape(B, OUT_DIM)


def init_params(key):
    """Deterministic init matching nn.Linear default (uniform +-1/sqrt(fan_in))."""
    k1, k2, k3, k4 = jax.random.split(key, 4)
    bound1 = 1.0 / math.sqrt(IN_DIM)
    bound2 = 1.0 / math.sqrt(HID_DIM)
    # stored as (in, out) -- i.e. transpose of torch's (out, in) weight
    w1 = jax.random.uniform(k1, (IN_DIM, HID_DIM), jnp.float32, -bound1, bound1)
    b1 = jax.random.uniform(k2, (1, HID_DIM), jnp.float32, -bound1, bound1)
    w2 = jax.random.uniform(k3, (HID_DIM, OUT_DIM), jnp.float32, -bound2, bound2)
    b2 = jax.random.uniform(k4, (1, OUT_DIM), jnp.float32, -bound2, bound2)
    return w1, b1, w2, b2


def reference(x, w1, b1, w2, b2, *, matmul_dtype=None, gelu="exact"):
    """Pure-JAX reference replicating the kernel's numerics choices."""
    if matmul_dtype is not None:
        h = jnp.dot(x.astype(matmul_dtype), w1.astype(matmul_dtype),
                    preferred_element_type=jnp.float32)
    else:
        h = jnp.dot(x, w1, preferred_element_type=jnp.float32)
    h = h + b1.reshape(1, HID_DIM)
    if gelu == "tanh":
        h = 0.5 * h * (1.0 + jnp.tanh(_SQRT_2_OVER_PI * (h + 0.044715 * h ** 3)))
    else:
        h = 0.5 * h * (1.0 + lax.erf(h * _INV_SQRT2))
    # final projection as an f32 multiply + reduce (same as the kernel)
    v = jnp.sum(h * w2.reshape(1, HID_DIM), axis=-1, keepdims=True)
    return v + b2.reshape(1, 1)


if __name__ == "__main__":
    key = jax.random.PRNGKey(0)
    kx1, kx2, kp = jax.random.split(key, 3)

    w1, b1, w2, b2 = init_params(kp)

    # 1) small batch, default path (bf16 MXU operands, exact-erf GELU)
    B1 = 16
    x1 = jax.random.normal(kx1, (B1, IN_DIM), jnp.float32)
    out1 = jax.block_until_ready(value_head(x1, w1, b1, w2, b2))
    ref1 = reference(x1, w1, b1, w2, b2, matmul_dtype=jnp.bfloat16)
    assert out1.shape == (B1, OUT_DIM)
    assert jnp.allclose(out1, ref1, atol=2e-3, rtol=2e-3), "mismatch (bf16 default)"

    # 2) batch not divisible by the tile -> OOB tail block (no jnp.pad copy),
    #    multi-block lane-dense output
    B2 = 272
    x2 = jax.random.normal(kx2, (B2, IN_DIM), jnp.float32)
    out2 = jax.block_until_ready(value_head(x2, w1, b1, w2, b2, block_b=128))
    ref2 = reference(x2, w1, b1, w2, b2, matmul_dtype=jnp.bfloat16)
    assert out2.shape == (B2, OUT_DIM)
    assert jnp.allclose(out2, ref2, atol=2e-3, rtol=2e-3), "mismatch (tiled batch)"

    # 3) f32-operand path (DEFAULT MXU precision, same as plain jnp on TPU)
    out3 = jax.block_until_ready(value_head(x1, w1, b1, w2, b2, matmul_dtype=None))
    ref3 = reference(x1, w1, b1, w2, b2, matmul_dtype=None)
    assert jnp.allclose(out3, ref3, atol=1e-4, rtol=1e-4), "mismatch (f32 path)"

    # 4) tanh-GELU (EUP) path, gated behind a flag
    out4 = jax.block_until_ready(value_head(x1, w1, b1, w2, b2, gelu="tanh"))
    ref4 = reference(x1, w1, b1, w2, b2, matmul_dtype=jnp.bfloat16, gelu="tanh")
    assert jnp.allclose(out4, ref4, atol=2e-3, rtol=2e-3), "mismatch (tanh gelu)"

    # NaN-advantage check from the torch module (plain JAX glue outside kernel).
    # TODO(synk): torch prints 'NaN advantage' as a side effect; here we only compute the flag.
    _ = bool(jnp.isnan(out1).any() | jnp.isnan(out2).any())

    print("KERNEL_OK")
</pallas_src>

<mosaic_0001>
module attributes {stable_mosaic.version = 11 : i64} {
  func.func @value_head_kernel(%arg0: i32, %arg1: memref<16x1024xbf16, #tpu.memory_space<vmem>>, %arg2: memref<1024x512xbf16, #tpu.memory_space<vmem>>, %arg3: memref<1x512xf32, #tpu.memory_space<vmem>>, %arg4: memref<1x512xf32, #tpu.memory_space<vmem>>, %arg5: memref<1x1xf32, #tpu.memory_space<smem>>, %arg6: memref<1x16xf32, #tpu.memory_space<vmem>>) attributes {dimension_semantics = [#tpu.dimension_semantics<parallel>], iteration_bounds = array<i64: 1>, scalar_prefetch = 0 : i64, scratch_operands = 0 : i64, tpu.core_type = #tpu.core_type<tc>, window_params = [{transform_indices = @transform_0, window_bounds = array<i64: 16, 1024>}, {pipeline_mode = #tpu.pipeline_mode<synchronous>, transform_indices = @transform_1, window_bounds = array<i64: 1024, 512>}, {pipeline_mode = #tpu.pipeline_mode<synchronous>, transform_indices = @transform_2, window_bounds = array<i64: 1, 512>}, {pipeline_mode = #tpu.pipeline_mode<synchronous>, transform_indices = @transform_3, window_bounds = array<i64: 1, 512>}, {transform_indices = @transform_4, window_bounds = array<i64: 1, 1>}, {transform_indices = @transform_5, window_bounds = array<i64: 1, 16>}]} {
    %c0 = arith.constant 0 : index
    %c0_0 = arith.constant 0 : index
    %0 = vector.load %arg1[%c0, %c0_0] : memref<16x1024xbf16, #tpu.memory_space<vmem>>, vector<16x1024xbf16>
    %c0_1 = arith.constant 0 : index
    %c0_2 = arith.constant 0 : index
    %1 = vector.load %arg2[%c0_1, %c0_2] : memref<1024x512xbf16, #tpu.memory_space<vmem>>, vector<1024x512xbf16>
    %cst = arith.constant dense<0.000000e+00> : vector<16x512xf32>
    %2 = tpu.matmul %0, %1, %cst {dimension_numbers = #tpu.dot_dimension_numbers<[1], [0], [0], [1], [0, 0, 1, 1], [], []>} : vector<16x1024xbf16>, vector<1024x512xbf16>, vector<16x512xf32> -> vector<16x512xf32>
    %c0_3 = arith.constant 0 : index
    %c0_4 = arith.constant 0 : index
    %3 = vector.load %arg3[%c0_3, %c0_4] : memref<1x512xf32, #tpu.memory_space<vmem>>, vector<1x512xf32>
    %4 = vector.broadcast %3 : vector<1x512xf32> to vector<16x512xf32>
    %5 = arith.addf %2, %4 : vector<16x512xf32>
    %cst_5 = arith.constant 5.000000e-01 : f32
    %6 = vector.broadcast %cst_5 : f32 to vector<16x512xf32>
    %7 = arith.mulf %6, %5 : vector<16x512xf32>
    %cst_6 = arith.constant 0.707106769 : f32
    %8 = vector.broadcast %cst_6 : f32 to vector<16x512xf32>
    %9 = arith.mulf %5, %8 : vector<16x512xf32>
    %10 = math.erf %9 : vector<16x512xf32>
    %cst_7 = arith.constant 1.000000e+00 : f32
    %11 = vector.broadcast %cst_7 : f32 to vector<16x512xf32>
    %12 = arith.addf %11, %10 : vector<16x512xf32>
    %13 = arith.mulf %7, %12 : vector<16x512xf32>
    %c0_8 = arith.constant 0 : index
    %c0_9 = arith.constant 0 : index
    %14 = vector.load %arg4[%c0_8, %c0_9] : memref<1x512xf32, #tpu.memory_space<vmem>>, vector<1x512xf32>
    %15 = vector.broadcast %14 : vector<1x512xf32> to vector<16x512xf32>
    %16 = arith.mulf %13, %15 : vector<16x512xf32>
    %cst_10 = arith.constant dense<0.000000e+00> : vector<16xf32>
    %17 = vector.multi_reduction <add>, %16, %cst_10 [1] : vector<16x512xf32> to vector<16xf32>
    %c0_11 = arith.constant 0 : index
    %c0_12 = arith.constant 0 : index
    %18 = memref.load %arg5[%c0_11, %c0_12] : memref<1x1xf32, #tpu.memory_space<smem>>
    %19 = vector.broadcast %18 : f32 to vector<16xf32>
    %20 = arith.addf %17, %19 : vector<16xf32>
    %21 = vector.shape_cast %20 : vector<16xf32> to vector<1x16xf32>
    %c0_13 = arith.constant 0 : index
    %c0_14 = arith.constant 0 : index
    %22 = vector.load %arg6[%c0_13, %c0_14] : memref<1x16xf32, #tpu.memory_space<vmem>>, vector<1x16xf32>
    tpu.vector_store %arg6[%c0_13, %c0_14], %21 {strides = array<i32>} : memref<1x16xf32, #tpu.memory_space<vmem>>, vector<1x16xf32>,
    return
  }
  func.func @transform_0(%arg0: i32) -> (i32, i32) {
    %c0_i32 = arith.constant 0 : i32
    %c0_i32_0 = arith.constant 0 : i32
    return %arg0, %c0_i32 : i32, i32
  }
  func.func @transform_1(%arg0: i32) -> (i32, i32) {
    %c0_i32 = arith.constant 0 : i32
    %c0_i32_0 = arith.constant 0 : i32
    %c0_i32_1 = arith.constant 0 : i32
    return %c0_i32, %c0_i32_0 : i32, i32
  }
  func.func @transform_2(%arg0: i32) -> (i32, i32) {
    %c0_i32 = arith.constant 0 : i32
    %c0_i32_0 = arith.constant 0 : i32
    %c0_i32_1 = arith.constant 0 : i32
    return %c0_i32, %c0_i32_0 : i32, i32
  }
  func.func @transform_3(%arg0: i32) -> (i32, i32) {
    %c0_i32 = arith.constant 0 : i32
    %c0_i32_0 = arith.constant 0 : i32
    %c0_i32_1 = arith.constant 0 : i32
    return %c0_i32, %c0_i32_0 : i32, i32
  }
  func.func @transform_4(%arg0: i32) -> (i32, i32) {
    %c0_i32 = arith.constant 0 : i32
    %c0_i32_0 = arith.constant 0 : i32
    %c0_i32_1 = arith.constant 0 : i32
    return %c0_i32, %c0_i32_0 : i32, i32
  }
  func.func @transform_5(%arg0: i32) -> (i32, i32) {
    %c0_i32 = arith.constant 0 : i32
    %c0_i32_0 = arith.constant 0 : i32
    return %c0_i32, %arg0 : i32, i32
  }
}

</mosaic_0001>

<llo_original>
// kernel: tpu_custom_call.1
$region0: #{tpu_custom_call.1}
  #allocation0 [shape = 'u32[]', space=smem, size = 0x4, offset = 0x4, fixed_abs, tag = 'smem constant byte address 0x4 - core index']
  #allocation1 [shape = 'u32[72,128]{1,0:T(1,128)}', space=vmem, size = 0x9000, scoped, tag = 'internal scratch']
  #allocation2 [shape = 'f32[1,1]{1,0:T(1,128)S(6)}', space=smem, size = 0x200, scoped, tag = 'scoped memory for tpu_custom_call.1']
  %s0 = inlined_call_operand.hbm [shape: bf16[16,1024], index: 0, kind: input, shape index: {}]
  %s1 = inlined_call_operand.hbm [shape: bf16[1024,512], index: 1, kind: input, shape index: {}]
  %s2 = inlined_call_operand.hbm [shape: f32[1,512], index: 2, kind: input, shape index: {}]
  %s3 = inlined_call_operand.vmem [shape: f32[1,512], index: 3, kind: input, shape index: {}]
  %s4 = inlined_call_operand.<no memory space> [shape: f32[1,1], index: 4, kind: input, shape index: {}]
  %s5 = inlined_call_operand.hbm [shape: f32[1,16], index: 5, kind: output, shape index: {}]
  %s6 = sld [smem:[#allocation0]]
  $region42: #{tpu_custom_call.1} parent=0
    _
  %s8 = ssub.s32 1, %s6
  %s9 = scalar_select 0, %s8, %s6
  %10 = sst [smem:[#allocation2]] %s4
  $region1: #{tpu_custom_call.1} parent=0
    #allocation3 [shape = 'u8[32768]{0}', space=vmem, size = 0x8000, scoped, tag = 'input window, operand 0, single buffered']
    #allocation4 [shape = 's32[1]{0}', space=sflag, size = 0x4, scoped, tag = 'scoped memory for tpu_custom_call.1']
    #allocation5 [shape = 's32[1]{0}', space=sflag, size = 0x4, scoped, tag = 'scoped memory for tpu_custom_call.1']
    #allocation6 [shape = 'u8[1048576]{0}', space=vmem, size = 0x100000, scoped, tag = 'input window, operand 1, single buffered']
    #allocation7 [shape = 's32[1]{0}', space=sflag, size = 0x4, scoped, tag = 'scoped memory for tpu_custom_call.1']
    #allocation8 [shape = 'u8[2048]{0}', space=vmem, size = 0x800, scoped, tag = 'input window, operand 2, single buffered']
    #allocation9 [shape = 'u8[512]{0}', space=vmem, size = 0x400, scoped, tag = 'output window, operand 0, single buffered']
    %11 = vsyncpa [#allocation4], 0
    %12 = vsyncpa [#allocation7], 0
    %13 = vsyncpa [#allocation5], 0
    // Predicated region
    $region2: #{tpu_custom_call.1} parent=1 // pred_check
      _
    $region3: #{tpu_custom_call.1} parent=1 // pred_check_branch
      %15 = sbr.rel (0) target = $region5
    $region4: #{tpu_custom_call.1} parent=1 // pred_region
      %17 = vsyncadd [#allocation4], 0
      %s18 = sshll.u32 %s0, 4
      %s19 = int_to_ptr.hbm [resolvable:$true] %s18
      %s20 = sshll.u32 [#allocation3], 4
      %s21 = int_to_ptr.vmem [resolvable:$true] %s20
      %26 = dma.hbm_to_vmem [thread:$0]  %s19, 1024, %s21, [#allocation4], 512, 512, 32
    $region5: #{tpu_custom_call.1} parent=1 // pred_fallthru
      _
    // Predicated region
    $region6: #{tpu_custom_call.1} parent=1 // pred_check
      _
    $region7: #{tpu_custom_call.1} parent=1 // pred_check_branch
      %28 = sbr.rel (0) target = $region9
    $region8: #{tpu_custom_call.1} parent=1 // pred_region
      %30 = vsyncadd [#allocation7], 0
      %s31 = sshll.u32 %s1, 4
      %s32 = int_to_ptr.hbm [resolvable:$true] %s31
      %s33 = sshll.u32 [#allocation6], 4
      %s34 = int_to_ptr.vmem [resolvable:$true] %s33
      %39 = dma.hbm_to_vmem [thread:$0]  %s32, 32768, %s34, [#allocation7], 256, 256, 16
    $region9: #{tpu_custom_call.1} parent=1 // pred_fallthru
      _
    // Predicated region
    $region10: #{tpu_custom_call.1} parent=1 // pred_check
      _
    $region11: #{tpu_custom_call.1} parent=1 // pred_check_branch
      %41 = sbr.rel (0) target = $region13
    $region12: #{tpu_custom_call.1} parent=1 // pred_region
      %43 = vsyncadd [#allocation7], 0
      %s45 = sshll.u32 %s2, 4
      %s46 = int_to_ptr.hbm [resolvable:$true] %s45
      %s47 = sshll.u32 [#allocation8], 4
      %s48 = int_to_ptr.vmem [resolvable:$true] %s47
      %50 = dma.hbm_to_vmem [thread:$0]  %s46, 64, %s48, [#allocation7]
    $region13: #{tpu_custom_call.1} parent=1 // pred_fallthru
      _
    // Predicated region
    $region14: #{tpu_custom_call.1} parent=1 // pred_check
      _
    $region15: #{tpu_custom_call.1} parent=1 // pred_check_branch
      %52 = sbr.rel (0) target = $region17
    $region16: #{tpu_custom_call.1} parent=1 // pred_region
      _
    $region17: #{tpu_custom_call.1} parent=1 // pred_fallthru
      _
    // Predicated region
    $region18: #{tpu_custom_call.1} parent=1 // pred_check
      _
    $region19: #{tpu_custom_call.1} parent=1 // pred_check_branch
      %54 = sbr.rel (0) target = $region21
    $region20: #{tpu_custom_call.1} parent=1 // pred_region
      _
    $region21: #{tpu_custom_call.1} parent=1 // pred_fallthru
      _
    // Predicated region
    $region22: #{tpu_custom_call.1} parent=1 // pred_check
      _
    $region23: #{tpu_custom_call.1} parent=1 // pred_check_branch
      %56 = sbr.rel (0) target = $region25
    $region24: #{tpu_custom_call.1} parent=1 // pred_region
      %58 = dma.done [#allocation4], 1024
    $region25: #{tpu_custom_call.1} parent=1 // pred_fallthru
      _
    // Predicated region
    $region26: #{tpu_custom_call.1} parent=1 // pred_check
      _
    $region27: #{tpu_custom_call.1} parent=1 // pred_check_branch
      %60 = sbr.rel (0) target = $region29
    $region28: #{tpu_custom_call.1} parent=1 // pred_region
      %62 = dma.done [#allocation7], 32768
    $region29: #{tpu_custom_call.1} parent=1 // pred_fallthru
      _
    // Predicated region
    $region30: #{tpu_custom_call.1} parent=1 // pred_check
      _
    $region31: #{tpu_custom_call.1} parent=1 // pred_check_branch
      %64 = sbr.rel (0) target = $region33
    $region32: #{tpu_custom_call.1} parent=1 // pred_region
      %66 = dma.done [#allocation7], 64
    $region33: #{tpu_custom_call.1} parent=1 // pred_fallthru
      _
    %v67 = vld [vmem:[#allocation3] sm:$0xff]
    %v68 = vld [vmem:[#allocation3 + $0x8] sm:$0xff]
    %v69 = vld [vmem:[#allocation3 + $0x10] sm:$0xff]
    %v70 = vld [vmem:[#allocation3 + $0x18] sm:$0xff]
    %v71 = vld [vmem:[#allocation3 + $0x20] sm:$0xff]
    %v72 = vld [vmem:[#allocation3 + $0x28] sm:$0xff]
    %v73 = vld [vmem:[#allocation3 + $0x30] sm:$0xff]
    %v74 = vld [vmem:[#allocation3 + $0x38] sm:$0xff]
    %v75 = vld [vmem:[#allocation6] sm:$0xff]
    %v76 = vld [vmem:[#allocation6 + $0x8] sm:$0xff]
    %v77 = vld [vmem:[#allocation6 + $0x10] sm:$0xff]
    %v78 = vld [vmem:[#allocation6 + $0x18] sm:$0xff]
    %v79 = vld [vmem:[#allocation6 + $0x20] sm:$0xff]
    %v80 = vld [vmem:[#allocation6 + $0x28] sm:$0xff]
    %v81 = vld [vmem:[#allocation6 + $0x30] sm:$0xff]
    %v82 = vld [vmem:[#allocation6 + $0x38] sm:$0xff]
    %v83 = vld [vmem:[#allocation6 + $0x40] sm:$0xff]
    %v84 = vld [vmem:[#allocation6 + $0x48] sm:$0xff]
    %v85 = vld [vmem:[#allocation6 + $0x50] sm:$0xff]
    %v86 = vld [vmem:[#allocation6 + $0x58] sm:$0xff]
    %v87 = vld [vmem:[#allocation6 + $0x60] sm:$0xff]
    %v88 = vld [vmem:[#allocation6 + $0x68] sm:$0xff]
    %v89 = vld [vmem:[#allocation6 + $0x70] sm:$0xff]
    %v90 = vld [vmem:[#allocation6 + $0x78] sm:$0xff]
    %v91 = vld [vmem:[#allocation6 + $0x80] sm:$0xff]
    %v92 = vld [vmem:[#allocation6 + $0x88] sm:$0xff]
    %v93 = vld [vmem:[#allocation6 + $0x90] sm:$0xff]
    %v94 = vld [vmem:[#allocation6 + $0x98] sm:$0xff]
    %v95 = vld [vmem:[#allocation6 + $0xa0] sm:$0xff]
    %v96 = vld [vmem:[#allocation6 + $0xa8] sm:$0xff]
    %v97 = vld [vmem:[#allocation6 + $0xb0] sm:$0xff]
    %v98 = vld [vmem:[#allocation6 + $0xb8] sm:$0xff]
    %v99 = vld [vmem:[#allocation6 + $0xc0] sm:$0xff]
    %v100 = vld [vmem:[#allocation6 + $0xc8] sm:$0xff]
    %v101 = vld [vmem:[#allocation6 + $0xd0] sm:$0xff]
    %v102 = vld [vmem:[#allocation6 + $0xd8] sm:$0xff]
    %v103 = vld [vmem:[#allocation6 + $0xe0] sm:$0xff]
    %v104 = vld [vmem:[#allocation6 + $0xe8] sm:$0xff]
    %v105 = vld [vmem:[#allocation6 + $0xf0] sm:$0xff]
    %v106 = vld [vmem:[#allocation6 + $0xf8] sm:$0xff]
    %v107 = vld [vmem:[#allocation6 + $0x100] sm:$0xff]
    %v108 = vld [vmem:[#allocation6 + $0x108] sm:$0xff]
    %v109 = vld [vmem:[#allocation6 + $0x110] sm:$0xff]
    %v110 = vld [vmem:[#allocation6 + $0x118] sm:$0xff]
    %v111 = vld [vmem:[#allocation6 + $0x120] sm:$0xff]
    %v112 = vld [vmem:[#allocation6 + $0x128] sm:$0xff]
    %v113 = vld [vmem:[#allocation6 + $0x130] sm:$0xff]
    %v114 = vld [vmem:[#allocation6 + $0x138] sm:$0xff]
    %v115 = vld [vmem:[#allocation6 + $0x140] sm:$0xff]
    %v116 = vld [vmem:[#allocation6 + $0x148] sm:$0xff]
    %v117 = vld [vmem:[#allocation6 + $0x150] sm:$0xff]
    %v118 = vld [vmem:[#allocation6 + $0x158] sm:$0xff]
    %v119 = vld [vmem:[#allocation6 + $0x160] sm:$0xff]
    %v120 = vld [vmem:[#allocation6 + $0x168] sm:$0xff]
    %v121 = vld [vmem:[#allocation6 + $0x170] sm:$0xff]
    %v122 = vld [vmem:[#allocation6 + $0x178] sm:$0xff]
    %v123 = vld [vmem:[#allocation6 + $0x180] sm:$0xff]
    %v124 = vld [vmem:[#allocation6 + $0x188] sm:$0xff]
    %v125 = vld [vmem:[#allocation6 + $0x190] sm:$0xff]
    %v126 = vld [vmem:[#allocation6 + $0x198] sm:$0xff]
    %v127 = vld [vmem:[#allocation6 + $0x1a0] sm:$0xff]
    %v128 = vld [vmem:[#allocation6 + $0x1a8] sm:$0xff]
    %v129 = vld [vmem:[#allocation6 + $0x1b0] sm:$0xff]
    %v130 = vld [vmem:[#allocation6 + $0x1b8] sm:$0xff]
    %v131 = vld [vmem:[#allocation6 + $0x1c0] sm:$0xff]
    %v132 = vld [vmem:[#allocation6 + $0x1c8] sm:$0xff]
    %v133 = vld [vmem:[#allocation6 + $0x1d0] sm:$0xff]
    %v134 = vld [vmem:[#allocation6 + $0x1d8] sm:$0xff]
    %v135 = vld [vmem:[#allocation6 + $0x1e0] sm:$0xff]
    %v136 = vld [vmem:[#allocation6 + $0x1e8] sm:$0xff]
    %v137 = vld [vmem:[#allocation6 + $0x1f0] sm:$0xff]
    %v138 = vld [vmem:[#allocation6 + $0x1f8] sm:$0xff]
    %v139 = vld [vmem:[#allocation6 + $0x200] sm:$0xff]
    %v140 = vld [vmem:[#allocation6 + $0x208] sm:$0xff]
    %v141 = vld [vmem:[#allocation6 + $0x210] sm:$0xff]
    %v142 = vld [vmem:[#allocation6 + $0x218] sm:$0xff]
    %v143 = vld [vmem:[#allocation6 + $0x220] sm:$0xff]
    %v144 = vld [vmem:[#allocation6 + $0x228] sm:$0xff]
    %v145 = vld [vmem:[#allocation6 + $0x230] sm:$0xff]
    %v146 = vld [vmem:[#allocation6 + $0x238] sm:$0xff]
    %v147 = vld [vmem:[#allocation6 + $0x240] sm:$0xff]
    %v148 = vld [vmem:[#allocation6 + $0x248] sm:$0xff]
    %v149 = vld [vmem:[#allocation6 + $0x250] sm:$0xff]
    %v150 = vld [vmem:[#allocation6 + $0x258] sm:$0xff]
    %v151 = vld [vmem:[#allocation6 + $0x260] sm:$0xff]
    %v152 = vld [vmem:[#allocation6 + $0x268] sm:$0xff]
    %v153 = vld [vmem:[#allocation6 + $0x270] sm:$0xff]
    %v154 = vld [vmem:[#allocation6 + $0x278] sm:$0xff]
    %v155 = vld [vmem:[#allocation6 + $0x280] sm:$0xff]
    %v156 = vld [vmem:[#allocation6 + $0x288] sm:$0xff]
    %v157 = vld [vmem:[#allocation6 + $0x290] sm:$0xff]
    %v158 = vld [vmem:[#allocation6 + $0x298] sm:$0xff]
    %v159 = vld [vmem:[#allocation6 + $0x2a0] sm:$0xff]
    %v160 = vld [vmem:[#allocation6 + $0x2a8] sm:$0xff]
    %v161 = vld [vmem:[#allocation6 + $0x2b0] sm:$0xff]
    %v162 = vld [vmem:[#allocation6 + $0x2b8] sm:$0xff]
    %v163 = vld [vmem:[#allocation6 + $0x2c0] sm:$0xff]
    %v164 = vld [vmem:[#allocation6 + $0x2c8] sm:$0xff]
    %v165 = vld [vmem:[#allocation6 + $0x2d0] sm:$0xff]
    %v166 = vld [vmem:[#allocation6 + $0x2d8] sm:$0xff]
    %v167 = vld [vmem:[#allocation6 + $0x2e0] sm:$0xff]
    %v168 = vld [vmem:[#allocation6 + $0x2e8] sm:$0xff]
    %v169 = vld [vmem:[#allocation6 + $0x2f0] sm:$0xff]
    %v170 = vld [vmem:[#allocation6 + $0x2f8] sm:$0xff]
    %v171 = vld [vmem:[#allocation6 + $0x300] sm:$0xff]
    %v172 = vld [vmem:[#allocation6 + $0x308] sm:$0xff]
    %v173 = vld [vmem:[#allocation6 + $0x310] sm:$0xff]
    %v174 = vld [vmem:[#allocation6 + $0x318] sm:$0xff]
    %v175 = vld [vmem:[#allocation6 + $0x320] sm:$0xff]
    %v176 = vld [vmem:[#allocation6 + $0x328] sm:$0xff]
    %v177 = vld [vmem:[#allocation6 + $0x330] sm:$0xff]
    %v178 = vld [vmem:[#allocation6 + $0x338] sm:$0xff]
    %v179 = vld [vmem:[#allocation6 + $0x340] sm:$0xff]
    %v180 = vld [vmem:[#allocation6 + $0x348] sm:$0xff]
    %v181 = vld [vmem:[#allocation6 + $0x350] sm:$0xff]
    %v182 = vld [vmem:[#allocation6 + $0x358] sm:$0xff]
    %v183 = vld [vmem:[#allocation6 + $0x360] sm:$0xff]
    %v184 = vld [vmem:[#allocation6 + $0x368] sm:$0xff]
    %v185 = vld [vmem:[#allocation6 + $0x370] sm:$0xff]
    %v186 = vld [vmem:[#allocation6 + $0x378] sm:$0xff]
    %v187 = vld [vmem:[#allocation6 + $0x380] sm:$0xff]
    %v188 = vld [vmem:[#allocation6 + $0x388] sm:$0xff]
    %v189 = vld [vmem:[#allocation6 + $0x390] sm:$0xff]
    %v190 = vld [vmem:[#allocation6 + $0x398] sm:$0xff]
    %v191 = vld [vmem:[#allocation6 + $0x3a0] sm:$0xff]
    %v192 = vld [vmem:[#allocation6 + $0x3a8] sm:$0xff]
    %v193 = vld [vmem:[#allocation6 + $0x3b0] sm:$0xff]
    %v194 = vld [vmem:[#allocation6 + $0x3b8] sm:$0xff]
    %v195 = vld [vmem:[#allocation6 + $0x3c0] sm:$0xff]
    %v196 = vld [vmem:[#allocation6 + $0x3c8] sm:$0xff]
    %v197 = vld [vmem:[#allocation6 + $0x3d0] sm:$0xff]
    %v198 = vld [vmem:[#allocation6 + $0x3d8] sm:$0xff]
    %v199 = vld [vmem:[#allocation6 + $0x3e0] sm:$0xff]
    %v200 = vld [vmem:[#allocation6 + $0x3e8] sm:$0xff]
    %v201 = vld [vmem:[#allocation6 + $0x3f0] sm:$0xff]
    %v202 = vld [vmem:[#allocation6 + $0x3f8] sm:$0xff]
    %v203 = vld [vmem:[#allocation6 + $0x400] sm:$0xff]
    %v204 = vld [vmem:[#allocation6 + $0x408] sm:$0xff]
    %v205 = vld [vmem:[#allocation6 + $0x410] sm:$0xff]
    %v206 = vld [vmem:[#allocation6 + $0x418] sm:$0xff]
    %v207 = vld [vmem:[#allocation6 + $0x420] sm:$0xff]
    %v208 = vld [vmem:[#allocation6 + $0x428] sm:$0xff]
    %v209 = vld [vmem:[#allocation6 + $0x430] sm:$0xff]
    %v210 = vld [vmem:[#allocation6 + $0x438] sm:$0xff]
    %v211 = vld [vmem:[#allocation6 + $0x440] sm:$0xff]
    %v212 = vld [vmem:[#allocation6 + $0x448] sm:$0xff]
    %v213 = vld [vmem:[#allocation6 + $0x450] sm:$0xff]
    %v214 = vld [vmem:[#allocation6 + $0x458] sm:$0xff]
    %v215 = vld [vmem:[#allocation6 + $0x460] sm:$0xff]
    %v216 = vld [vmem:[#allocation6 + $0x468] sm:$0xff]
    %v217 = vld [vmem:[#allocation6 + $0x470] sm:$0xff]
    %v218 = vld [vmem:[#allocation6 + $0x478] sm:$0xff]
    %v219 = vld [vmem:[#allocation6 + $0x480] sm:$0xff]
    %v220 = vld [vmem:[#allocation6 + $0x488] sm:$0xff]
    %v221 = vld [vmem:[#allocation6 + $0x490] sm:$0xff]
    %v222 = vld [vmem:[#allocation6 + $0x498] sm:$0xff]
    %v223 = vld [vmem:[#allocation6 + $0x4a0] sm:$0xff]
    %v224 = vld [vmem:[#allocation6 + $0x4a8] sm:$0xff]
    %v225 = vld [vmem:[#allocation6 + $0x4b0] sm:$0xff]
    %v226 = vld [vmem:[#allocation6 + $0x4b8] sm:$0xff]
    %v227 = vld [vmem:[#allocation6 + $0x4c0] sm:$0xff]
    %v228 = vld [vmem:[#allocation6 + $0x4c8] sm:$0xff]
    %v229 = vld [vmem:[#allocation6 + $0x4d0] sm:$0xff]
    %v230 = vld [vmem:[#allocation6 + $0x4d8] sm:$0xff]
    %v231 = vld [vmem:[#allocation6 + $0x4e0] sm:$0xff]
    %v232 = vld [vmem:[#allocation6 + $0x4e8] sm:$0xff]
    %v233 = vld [vmem:[#allocation6 + $0x4f0] sm:$0xff]
    %v234 = vld [vmem:[#allocation6 + $0x4f8] sm:$0xff]
    %v235 = vld [vmem:[#allocation6 + $0x500] sm:$0xff]
    %v236 = vld [vmem:[#allocation6 + $0x508] sm:$0xff]
    %v237 = vld [vmem:[#allocation6 + $0x510] sm:$0xff]
    %v238 = vld [vmem:[#allocation6 + $0x518] sm:$0xff]
    %v239 = vld [vmem:[#allocation6 + $0x520] sm:$0xff]
    %v240 = vld [vmem:[#allocation6 + $0x528] sm:$0xff]
    %v241 = vld [vmem:[#allocation6 + $0x530] sm:$0xff]
    %v242 = vld [vmem:[#allocation6 + $0x538] sm:$0xff]
    %v243 = vld [vmem:[#allocation6 + $0x540] sm:$0xff]
    %v244 = vld [vmem:[#allocation6 + $0x548] sm:$0xff]
    %v245 = vld [vmem:[#allocation6 + $0x550] sm:$0xff]
    %v246 = vld [vmem:[#allocation6 + $0x558] sm:$0xff]
    %v247 = vld [vmem:[#allocation6 + $0x560] sm:$0xff]
    %v248 = vld [vmem:[#allocation6 + $0x568] sm:$0xff]
    %v249 = vld [vmem:[#allocation6 + $0x570] sm:$0xff]
    %v250 = vld [vmem:[#allocation6 + $0x578] sm:$0xff]
    %v251 = vld [vmem:[#allocation6 + $0x580] sm:$0xff]
    %v252 = vld [vmem:[#allocation6 + $0x588] sm:$0xff]
    %v253 = vld [vmem:[#allocation6 + $0x590] sm:$0xff]
    %v254 = vld [vmem:[#allocation6 + $0x598] sm:$0xff]
    %v255 = vld [vmem:[#allocation6 + $0x5a0] sm:$0xff]
    %v256 = vld [vmem:[#allocation6 + $0x5a8] sm:$0xff]
    %v257 = vld [vmem:[#allocation6 + $0x5b0] sm:$0xff]
    %v258 = vld [vmem:[#allocation6 + $0x5b8] sm:$0xff]
    %v259 = vld [vmem:[#allocation6 + $0x5c0] sm:$0xff]
    %v260 = vld [vmem:[#allocation6 + $0x5c8] sm:$0xff]
    %v261 = vld [vmem:[#allocation6 + $0x5d0] sm:$0xff]
    %v262 = vld [vmem:[#allocation6 + $0x5d8] sm:$0xff]
    %v263 = vld [vmem:[#allocation6 + $0x5e0] sm:$0xff]
    %v264 = vld [vmem:[#allocation6 + $0x5e8] sm:$0xff]
    %v265 = vld [vmem:[#allocation6 + $0x5f0] sm:$0xff]
    %v266 = vld [vmem:[#allocation6 + $0x5f8] sm:$0xff]
    %v267 = vld [vmem:[#allocation6 + $0x600] sm:$0xff]
    %v268 = vld [vmem:[#allocation6 + $0x608] sm:$0xff]
    %v269 = vld [vmem:[#allocation6 + $0x610] sm:$0xff]
    %v270 = vld [vmem:[#allocation6 + $0x618] sm:$0xff]
    %v271 = vld [vmem:[#allocation6 + $0x620] sm:$0xff]
    %v272 = vld [vmem:[#allocation6 + $0x628] sm:$0xff]
    %v273 = vld [vmem:[#allocation6 + $0x630] sm:$0xff]
    %v274 = vld [vmem:[#allocation6 + $0x638] sm:$0xff]
    %v275 = vld [vmem:[#allocation6 + $0x640] sm:$0xff]
    %v276 = vld [vmem:[#allocation6 + $0x648] sm:$0xff]
    %v277 = vld [vmem:[#allocation6 + $0x650] sm:$0xff]
    %v278 = vld [vmem:[#allocation6 + $0x658] sm:$0xff]
    %v279 = vld [vmem:[#allocation6 + $0x660] sm:$0xff]
    %v280 = vld [vmem:[#allocation6 + $0x668] sm:$0xff]
    %v281 = vld [vmem:[#allocation6 + $0x670] sm:$0xff]
    %v282 = vld [vmem:[#allocation6 + $0x678] sm:$0xff]
    %v283 = vld [vmem:[#allocation6 + $0x680] sm:$0xff]
    %v284 = vld [vmem:[#allocation6 + $0x688] sm:$0xff]
    %v285 = vld [vmem:[#allocation6 + $0x690] sm:$0xff]
    %v286 = vld [vmem:[#allocation6 + $0x698] sm:$0xff]
    %v287 = vld [vmem:[#allocation6 + $0x6a0] sm:$0xff]
    %v288 = vld [vmem:[#allocation6 + $0x6a8] sm:$0xff]
    %v289 = vld [vmem:[#allocation6 + $0x6b0] sm:$0xff]
    %v290 = vld [vmem:[#allocation6 + $0x6b8] sm:$0xff]
    %v291 = vld [vmem:[#allocation6 + $0x6c0] sm:$0xff]
    %v292 = vld [vmem:[#allocation6 + $0x6c8] sm:$0xff]
    %v293 = vld [vmem:[#allocation6 + $0x6d0] sm:$0xff]
    %v294 = vld [vmem:[#allocation6 + $0x6d8] sm:$0xff]
    %v295 = vld [vmem:[#allocation6 + $0x6e0] sm:$0xff]
    %v296 = vld [vmem:[#allocation6 + $0x6e8] sm:$0xff]
    %v297 = vld [vmem:[#allocation6 + $0x6f0] sm:$0xff]
    %v298 = vld [vmem:[#allocation6 + $0x6f8] sm:$0xff]
    %v299 = vld [vmem:[#allocation6 + $0x700] sm:$0xff]
    %v300 = vld [vmem:[#allocation6 + $0x708] sm:$0xff]
    %v301 = vld [vmem:[#allocation6 + $0x710] sm:$0xff]
    %v302 = vld [vmem:[#allocation6 + $0x718] sm:$0xff]
    %v303 = vld [vmem:[#allocation6 + $0x720] sm:$0xff]
    %v304 = vld [vmem:[#allocation6 + $0x728] sm:$0xff]
    %v305 = vld [vmem:[#allocation6 + $0x730] sm:$0xff]
    %v306 = vld [vmem:[#allocation6 + $0x738] sm:$0xff]
    %v307 = vld [vmem:[#allocation6 + $0x740] sm:$0xff]
    %v308 = vld [vmem:[#allocation6 + $0x748] sm:$0xff]
    %v309 = vld [vmem:[#allocation6 + $0x750] sm:$0xff]
    %v310 = vld [vmem:[#allocation6 + $0x758] sm:$0xff]
    %v311 = vld [vmem:[#allocation6 + $0x760] sm:$0xff]
    %v312 = vld [vmem:[#allocation6 + $0x768] sm:$0xff]
    %v313 = vld [vmem:[#allocation6 + $0x770] sm:$0xff]
    %v314 = vld [vmem:[#allocation6 + $0x778] sm:$0xff]
    %v315 = vld [vmem:[#allocation6 + $0x780] sm:$0xff]
    %v316 = vld [vmem:[#allocation6 + $0x788] sm:$0xff]
    %v317 = vld [vmem:[#allocation6 + $0x790] sm:$0xff]
    %v318 = vld [vmem:[#allocation6 + $0x798] sm:$0xff]
    %v319 = vld [vmem:[#allocation6 + $0x7a0] sm:$0xff]
    %v320 = vld [vmem:[#allocation6 + $0x7a8] sm:$0xff]
    %v321 = vld [vmem:[#allocation6 + $0x7b0] sm:$0xff]
    %v322 = vld [vmem:[#allocation6 + $0x7b8] sm:$0xff]
    %v323 = vld [vmem:[#allocation6 + $0x7c0] sm:$0xff]
    %v324 = vld [vmem:[#allocation6 + $0x7c8] sm:$0xff]
    %v325 = vld [vmem:[#allocation6 + $0x7d0] sm:$0xff]
    %v326 = vld [vmem:[#allocation6 + $0x7d8] sm:$0xff]
    %v327 = vld [vmem:[#allocation6 + $0x7e0] sm:$0xff]
    %v328 = vld [vmem:[#allocation6 + $0x7e8] sm:$0xff]
    %v329 = vld [vmem:[#allocation6 + $0x7f0] sm:$0xff]
    %v330 = vld [vmem:[#allocation6 + $0x7f8] sm:$0xff]
    %v331 = vld [vmem:[#allocation8] sm:$0xf]
    %v333 = vperm.slane %v331, 0
    %v334 = vperm.slane %v331, 1
    %v335 = vperm.slane %v331, 2
    %v336 = vperm.slane %v331, 3
    %v349 = vunpack.c.l.b16 %v67
    %v350 = vunpack.c.h.b16 %v67
    %v351 = vunpack.c.l.b16 %v68
    %v352 = vunpack.c.h.b16 %v68
    %v353 = vunpack.c.l.b16 %v69
    %v354 = vunpack.c.h.b16 %v69
    %v355 = vunpack.c.l.b16 %v70
    %v356 = vunpack.c.h.b16 %v70
    %v357 = vunpack.c.l.b16 %v71
    %v358 = vunpack.c.h.b16 %v71
    %v359 = vunpack.c.l.b16 %v72
    %v360 = vunpack.c.h.b16 %v72
    %v361 = vunpack.c.l.b16 %v73
    %v362 = vunpack.c.h.b16 %v73
    %v363 = vunpack.c.l.b16 %v74
    %v364 = vunpack.c.h.b16 %v74
    %v365 = vpack.c.b16 %v357, %v349
    %v366 = vpack.c.b16 %v358, %v350
    %v367 = vpack.c.b16 %v359, %v351
    %v368 = vpack.c.b16 %v360, %v352
    %v369 = vpack.c.b16 %v361, %v353
    %v370 = vpack.c.b16 %v362, %v354
    %v371 = vpack.c.b16 %v363, %v355
    %v372 = vpack.c.b16 %v364, %v356
    %v637 = vunpack.c.l.b16 %v75
    %v638 = vunpack.c.h.b16 %v75
    %v639 = vunpack.c.l.b16 %v76
    %v640 = vunpack.c.h.b16 %v76
    %v641 = vunpack.c.l.b16 %v77
    %v642 = vunpack.c.h.b16 %v77
    %v643 = vunpack.c.l.b16 %v78
    %v644 = vunpack.c.h.b16 %v78
    %v645 = vunpack.c.l.b16 %v79
    %v646 = vunpack.c.h.b16 %v79
    %v647 = vunpack.c.l.b16 %v80
    %v648 = vunpack.c.h.b16 %v80
    %v649 = vunpack.c.l.b16 %v81
    %v650 = vunpack.c.h.b16 %v81
    %v651 = vunpack.c.l.b16 %v82
    %v652 = vunpack.c.h.b16 %v82
    %v653 = vunpack.c.l.b16 %v83
    %v654 = vunpack.c.h.b16 %v83
    %v655 = vunpack.c.l.b16 %v84
    %v656 = vunpack.c.h.b16 %v84
    %v657 = vunpack.c.l.b16 %v85
    %v658 = vunpack.c.h.b16 %v85
    %v659 = vunpack.c.l.b16 %v86
    %v660 = vunpack.c.h.b16 %v86
    %v661 = vunpack.c.l.b16 %v87
    %v662 = vunpack.c.h.b16 %v87
    %v663 = vunpack.c.l.b16 %v88
    %v664 = vunpack.c.h.b16 %v88
    %v665 = vunpack.c.l.b16 %v89
    %v666 = vunpack.c.h.b16 %v89
    %v667 = vunpack.c.l.b16 %v90
    %v668 = vunpack.c.h.b16 %v90
    %v669 = vunpack.c.l.b16 %v91
    %v670 = vunpack.c.h.b16 %v91
    %v671 = vunpack.c.l.b16 %v92
    %v672 = vunpack.c.h.b16 %v92
    %v673 = vunpack.c.l.b16 %v93
    %v674 = vunpack.c.h.b16 %v93
    %v675 = vunpack.c.l.b16 %v94
    %v676 = vunpack.c.h.b16 %v94
    %v677 = vunpack.c.l.b16 %v95
    %v678 = vunpack.c.h.b16 %v95
    %v679 = vunpack.c.l.b16 %v96
    %v680 = vunpack.c.h.b16 %v96
    %v681 = vunpack.c.l.b16 %v97
    %v682 = vunpack.c.h.b16 %v97
    %v683 = vunpack.c.l.b16 %v98
    %v684 = vunpack.c.h.b16 %v98
    %v685 = vunpack.c.l.b16 %v99
    %v686 = vunpack.c.h.b16 %v99
    %v687 = vunpack.c.l.b16 %v100
    %v688 = vunpack.c.h.b16 %v100
    %v689 = vunpack.c.l.b16 %v101
    %v690 = vunpack.c.h.b16 %v101
    %v691 = vunpack.c.l.b16 %v102
    %v692 = vunpack.c.h.b16 %v102
    %v693 = vunpack.c.l.b16 %v103
    %v694 = vunpack.c.h.b16 %v103
    %v695 = vunpack.c.l.b16 %v104
    %v696 = vunpack.c.h.b16 %v104
    %v697 = vunpack.c.l.b16 %v105
    %v698 = vunpack.c.h.b16 %v105
    %v699 = vunpack.c.l.b16 %v106
    %v700 = vunpack.c.h.b16 %v106
    %v701 = vunpack.c.l.b16 %v107
    %v702 = vunpack.c.h.b16 %v107
    %v703 = vunpack.c.l.b16 %v108
    %v704 = vunpack.c.h.b16 %v108
    %v705 = vunpack.c.l.b16 %v109
    %v706 = vunpack.c.h.b16 %v109
    %v707 = vunpack.c.l.b16 %v110
    %v708 = vunpack.c.h.b16 %v110
    %v709 = vunpack.c.l.b16 %v111
    %v710 = vunpack.c.h.b16 %v111
    %v711 = vunpack.c.l.b16 %v112
    %v712 = vunpack.c.h.b16 %v112
    %v713 = vunpack.c.l.b16 %v113
    %v714 = vunpack.c.h.b16 %v113
    %v715 = vunpack.c.l.b16 %v114
    %v716 = vunpack.c.h.b16 %v114
    %v717 = vunpack.c.l.b16 %v115
    %v718 = vunpack.c.h.b16 %v115
    %v719 = vunpack.c.l.b16 %v116
    %v720 = vunpack.c.h.b16 %v116
    %v721 = vunpack.c.l.b16 %v117
    %v722 = vunpack.c.h.b16 %v117
    %v723 = vunpack.c.l.b16 %v118
    %v724 = vunpack.c.h.b16 %v118
    %v725 = vunpack.c.l.b16 %v119
    %v726 = vunpack.c.h.b16 %v119
    %v727 = vunpack.c.l.b16 %v120
    %v728 = vunpack.c.h.b16 %v120
    %v729 = vunpack.c.l.b16 %v121
    %v730 = vunpack.c.h.b16 %v121
    %v731 = vunpack.c.l.b16 %v122
    %v732 = vunpack.c.h.b16 %v122
    %v733 = vunpack.c.l.b16 %v123
    %v734 = vunpack.c.h.b16 %v123
    %v735 = vunpack.c.l.b16 %v124
    %v736 = vunpack.c.h.b16 %v124
    %v737 = vunpack.c.l.b16 %v125
    %v738 = vunpack.c.h.b16 %v125
    %v739 = vunpack.c.l.b16 %v126
    %v740 = vunpack.c.h.b16 %v126
    %v741 = vunpack.c.l.b16 %v127
    %v742 = vunpack.c.h.b16 %v127
    %v743 = vunpack.c.l.b16 %v128
    %v744 = vunpack.c.h.b16 %v128
    %v745 = vunpack.c.l.b16 %v129
    %v746 = vunpack.c.h.b16 %v129
    %v747 = vunpack.c.l.b16 %v130
    %v748 = vunpack.c.h.b16 %v130
    %v749 = vunpack.c.l.b16 %v131
    %v750 = vunpack.c.h.b16 %v131
    %v751 = vunpack.c.l.b16 %v132
    %v752 = vunpack.c.h.b16 %v132
    %v753 = vunpack.c.l.b16 %v133
    %v754 = vunpack.c.h.b16 %v133
    %v755 = vunpack.c.l.b16 %v134
    %v756 = vunpack.c.h.b16 %v134
    %v757 = vunpack.c.l.b16 %v135
    %v758 = vunpack.c.h.b16 %v135
    %v759 = vunpack.c.l.b16 %v136
    %v760 = vunpack.c.h.b16 %v136
    %v761 = vunpack.c.l.b16 %v137
    %v762 = vunpack.c.h.b16 %v137
    %v763 = vunpack.c.l.b16 %v138
    %v764 = vunpack.c.h.b16 %v138
    %v765 = vunpack.c.l.b16 %v139
    %v766 = vunpack.c.h.b16 %v139
    %v767 = vunpack.c.l.b16 %v140
    %v768 = vunpack.c.h.b16 %v140
    %v769 = vunpack.c.l.b16 %v141
    %v770 = vunpack.c.h.b16 %v141
    %v771 = vunpack.c.l.b16 %v142
    %v772 = vunpack.c.h.b16 %v142
    %v773 = vunpack.c.l.b16 %v143
    %v774 = vunpack.c.h.b16 %v143
    %v775 = vunpack.c.l.b16 %v144
    %v776 = vunpack.c.h.b16 %v144
    %v777 = vunpack.c.l.b16 %v145
    %v778 = vunpack.c.h.b16 %v145
    %v779 = vunpack.c.l.b16 %v146
    %v780 = vunpack.c.h.b16 %v146
    %v781 = vunpack.c.l.b16 %v147
    %v782 = vunpack.c.h.b16 %v147
    %v783 = vunpack.c.l.b16 %v148
    %v784 = vunpack.c.h.b16 %v148
    %v785 = vunpack.c.l.b16 %v149
    %v786 = vunpack.c.h.b16 %v149
    %v787 = vunpack.c.l.b16 %v150
    %v788 = vunpack.c.h.b16 %v150
    %v789 = vunpack.c.l.b16 %v151
    %v790 = vunpack.c.h.b16 %v151
    %v791 = vunpack.c.l.b16 %v152
    %v792 = vunpack.c.h.b16 %v152
    %v793 = vunpack.c.l.b16 %v153
    %v794 = vunpack.c.h.b16 %v153
    %v795 = vunpack.c.l.b16 %v154
    %v796 = vunpack.c.h.b16 %v154
    %v797 = vunpack.c.l.b16 %v155
    %v798 = vunpack.c.h.b16 %v155
    %v799 = vunpack.c.l.b16 %v156
    %v800 = vunpack.c.h.b16 %v156
    %v801 = vunpack.c.l.b16 %v157
    %v802 = vunpack.c.h.b16 %v157
    %v803 = vunpack.c.l.b16 %v158
    %v804 = vunpack.c.h.b16 %v158
    %v805 = vunpack.c.l.b16 %v159
    %v806 = vunpack.c.h.b16 %v159
    %v807 = vunpack.c.l.b16 %v160
    %v808 = vunpack.c.h.b16 %v160
    %v809 = vunpack.c.l.b16 %v161
    %v810 = vunpack.c.h.b16 %v161
    %v811 = vunpack.c.l.b16 %v162
    %v812 = vunpack.c.h.b16 %v162
    %v813 = vunpack.c.l.b16 %v163
    %v814 = vunpack.c.h.b16 %v163
    %v815 = vunpack.c.l.b16 %v164
    %v816 = vunpack.c.h.b16 %v164
    %v817 = vunpack.c.l.b16 %v165
    %v818 = vunpack.c.h.b16 %v165
    %v819 = vunpack.c.l.b16 %v166
    %v820 = vunpack.c.h.b16 %v166
    %v821 = vunpack.c.l.b16 %v167
    %v822 = vunpack.c.h.b16 %v167
    %v823 = vunpack.c.l.b16 %v168
    %v824 = vunpack.c.h.b16 %v168
    %v825 = vunpack.c.l.b16 %v169
    %v826 = vunpack.c.h.b16 %v169
    %v827 = vunpack.c.l.b16 %v170
    %v828 = vunpack.c.h.b16 %v170
    %v829 = vunpack.c.l.b16 %v171
    %v830 = vunpack.c.h.b16 %v171
    %v831 = vunpack.c.l.b16 %v172
    %v832 = vunpack.c.h.b16 %v172
    %v833 = vunpack.c.l.b16 %v173
    %v834 = vunpack.c.h.b16 %v173
    %v835 = vunpack.c.l.b16 %v174
    %v836 = vunpack.c.h.b16 %v174
    %v837 = vunpack.c.l.b16 %v175
    %v838 = vunpack.c.h.b16 %v175
    %v839 = vunpack.c.l.b16 %v176
    %v840 = vunpack.c.h.b16 %v176
    %v841 = vunpack.c.l.b16 %v177
    %v842 = vunpack.c.h.b16 %v177
    %v843 = vunpack.c.l.b16 %v178
    %v844 = vunpack.c.h.b16 %v178
    %v845 = vunpack.c.l.b16 %v179
    %v846 = vunpack.c.h.b16 %v179
    %v847 = vunpack.c.l.b16 %v180
    %v848 = vunpack.c.h.b16 %v180
    %v849 = vunpack.c.l.b16 %v181
    %v850 = vunpack.c.h.b16 %v181
    %v851 = vunpack.c.l.b16 %v182
    %v852 = vunpack.c.h.b16 %v182
    %v853 = vunpack.c.l.b16 %v183
    %v854 = vunpack.c.h.b16 %v183
    %v855 = vunpack.c.l.b16 %v184
    %v856 = vunpack.c.h.b16 %v184
    %v857 = vunpack.c.l.b16 %v185
    %v858 = vunpack.c.h.b16 %v185
    %v859 = vunpack.c.l.b16 %v186
    %v860 = vunpack.c.h.b16 %v186
    %v861 = vunpack.c.l.b16 %v187
    %v862 = vunpack.c.h.b16 %v187
    %v863 = vunpack.c.l.b16 %v188
    %v864 = vunpack.c.h.b16 %v188
    %v865 = vunpack.c.l.b16 %v189
    %v866 = vunpack.c.h.b16 %v189
    %v867 = vunpack.c.l.b16 %v190
    %v868 = vunpack.c.h.b16 %v190
    %v869 = vunpack.c.l.b16 %v191
    %v870 = vunpack.c.h.b16 %v191
    %v871 = vunpack.c.l.b16 %v192
    %v872 = vunpack.c.h.b16 %v192
    %v873 = vunpack.c.l.b16 %v193
    %v874 = vunpack.c.h.b16 %v193
    %v875 = vunpack.c.l.b16 %v194
    %v876 = vunpack.c.h.b16 %v194
    %v877 = vunpack.c.l.b16 %v195
    %v878 = vunpack.c.h.b16 %v195
    %v879 = vunpack.c.l.b16 %v196
    %v880 = vunpack.c.h.b16 %v196
    %v881 = vunpack.c.l.b16 %v197
    %v882 = vunpack.c.h.b16 %v197
    %v883 = vunpack.c.l.b16 %v198
    %v884 = vunpack.c.h.b16 %v198
    %v885 = vunpack.c.l.b16 %v199
    %v886 = vunpack.c.h.b16 %v199
    %v887 = vunpack.c.l.b16 %v200
    %v888 = vunpack.c.h.b16 %v200
    %v889 = vunpack.c.l.b16 %v201
    %v890 = vunpack.c.h.b16 %v201
    %v891 = vunpack.c.l.b16 %v202
    %v892 = vunpack.c.h.b16 %v202
    %v893 = vunpack.c.l.b16 %v203
    %v894 = vunpack.c.h.b16 %v203
    %v895 = vunpack.c.l.b16 %v204
    %v896 = vunpack.c.h.b16 %v204
    %v897 = vunpack.c.l.b16 %v205
    %v898 = vunpack.c.h.b16 %v205
    %v899 = vunpack.c.l.b16 %v206
    %v900 = vunpack.c.h.b16 %v206
    %v901 = vunpack.c.l.b16 %v207
    %v902 = vunpack.c.h.b16 %v207
    %v903 = vunpack.c.l.b16 %v208
    %v904 = vunpack.c.h.b16 %v208
    %v905 = vunpack.c.l.b16 %v209
    %v906 = vunpack.c.h.b16 %v209
    %v907 = vunpack.c.l.b16 %v210
    %v908 = vunpack.c.h.b16 %v210
    %v909 = vunpack.c.l.b16 %v211
    %v910 = vunpack.c.h.b16 %v211
    %v911 = vunpack.c.l.b16 %v212
    %v912 = vunpack.c.h.b16 %v212
    %v913 = vunpack.c.l.b16 %v213
    %v914 = vunpack.c.h.b16 %v213
    %v915 = vunpack.c.l.b16 %v214
    %v916 = vunpack.c.h.b16 %v214
    %v917 = vunpack.c.l.b16 %v215
    %v918 = vunpack.c.h.b16 %v215
    %v919 = vunpack.c.l.b16 %v216
    %v920 = vunpack.c.h.b16 %v216
    %v921 = vunpack.c.l.b16 %v217
    %v922 = vunpack.c.h.b16 %v217
    %v923 = vunpack.c.l.b16 %v218
    %v924 = vunpack.c.h.b16 %v218
    %v925 = vunpack.c.l.b16 %v219
    %v926 = vunpack.c.h.b16 %v219
    %v927 = vunpack.c.l.b16 %v220
    %v928 = vunpack.c.h.b16 %v220
    %v929 = vunpack.c.l.b16 %v221
    %v930 = vunpack.c.h.b16 %v221
    %v931 = vunpack.c.l.b16 %v222
    %v932 = vunpack.c.h.b16 %v222
    %v933 = vunpack.c.l.b16 %v223
    %v934 = vunpack.c.h.b16 %v223
    %v935 = vunpack.c.l.b16 %v224
    %v936 = vunpack.c.h.b16 %v224
    %v937 = vunpack.c.l.b16 %v225
    %v938 = vunpack.c.h.b16 %v225
    %v939 = vunpack.c.l.b16 %v226
    %v940 = vunpack.c.h.b16 %v226
    %v941 = vunpack.c.l.b16 %v227
    %v942 = vunpack.c.h.b16 %v227
    %v943 = vunpack.c.l.b16 %v228
    %v944 = vunpack.c.h.b16 %v228
    %v945 = vunpack.c.l.b16 %v229
    %v946 = vunpack.c.h.b16 %v229
    %v947 = vunpack.c.l.b16 %v230
    %v948 = vunpack.c.h.b16 %v230
    %v949 = vunpack.c.l.b16 %v231
    %v950 = vunpack.c.h.b16 %v231
    %v951 = vunpack.c.l.b16 %v232
    %v952 = vunpack.c.h.b16 %v232
    %v953 = vunpack.c.l.b16 %v233
    %v954 = vunpack.c.h.b16 %v233
    %v955 = vunpack.c.l.b16 %v234
    %v956 = vunpack.c.h.b16 %v234
    %v957 = vunpack.c.l.b16 %v235
    %v958 = vunpack.c.h.b16 %v235
    %v959 = vunpack.c.l.b16 %v236
    %v960 = vunpack.c.h.b16 %v236
    %v961 = vunpack.c.l.b16 %v237
    %v962 = vunpack.c.h.b16 %v237
    %v963 = vunpack.c.l.b16 %v238
    %v964 = vunpack.c.h.b16 %v238
    %v965 = vunpack.c.l.b16 %v239
    %v966 = vunpack.c.h.b16 %v239
    %v967 = vunpack.c.l.b16 %v240
    %v968 = vunpack.c.h.b16 %v240
    %v969 = vunpack.c.l.b16 %v241
    %v970 = vunpack.c.h.b16 %v241
    %v971 = vunpack.c.l.b16 %v242
    %v972 = vunpack.c.h.b16 %v242
    %v973 = vunpack.c.l.b16 %v243
    %v974 = vunpack.c.h.b16 %v243
    %v975 = vunpack.c.l.b16 %v244
    %v976 = vunpack.c.h.b16 %v244
    %v977 = vunpack.c.l.b16 %v245
    %v978 = vunpack.c.h.b16 %v245
    %v979 = vunpack.c.l.b16 %v246
    %v980 = vunpack.c.h.b16 %v246
    %v981 = vunpack.c.l.b16 %v247
    %v982 = vunpack.c.h.b16 %v247
    %v983 = vunpack.c.l.b16 %v248
    %v984 = vunpack.c.h.b16 %v248
    %v985 = vunpack.c.l.b16 %v249
    %v986 = vunpack.c.h.b16 %v249
    %v987 = vunpack.c.l.b16 %v250
    %v988 = vunpack.c.h.b16 %v250
    %v989 = vunpack.c.l.b16 %v251
    %v990 = vunpack.c.h.b16 %v251
    %v991 = vunpack.c.l.b16 %v252
    %v992 = vunpack.c.h.b16 %v252
    %v993 = vunpack.c.l.b16 %v253
    %v994 = vunpack.c.h.b16 %v253
    %v995 = vunpack.c.l.b16 %v254
    %v996 = vunpack.c.h.b16 %v254
    %v997 = vunpack.c.l.b16 %v255
    %v998 = vunpack.c.h.b16 %v255
    %v999 = vunpack.c.l.b16 %v256
    %v1000 = vunpack.c.h.b16 %v256
    %v1001 = vunpack.c.l.b16 %v257
    %v1002 = vunpack.c.h.b16 %v257
    %v1003 = vunpack.c.l.b16 %v258
    %v1004 = vunpack.c.h.b16 %v258
    %v1005 = vunpack.c.l.b16 %v259
    %v1006 = vunpack.c.h.b16 %v259
    %v1007 = vunpack.c.l.b16 %v260
    %v1008 = vunpack.c.h.b16 %v260
    %v1009 = vunpack.c.l.b16 %v261
    %v1010 = vunpack.c.h.b16 %v261
    %v1011 = vunpack.c.l.b16 %v262
    %v1012 = vunpack.c.h.b16 %v262
    %v1013 = vunpack.c.l.b16 %v263
    %v1014 = vunpack.c.h.b16 %v263
    %v1015 = vunpack.c.l.b16 %v264
    %v1016 = vunpack.c.h.b16 %v264
    %v1017 = vunpack.c.l.b16 %v265
    %v1018 = vunpack.c.h.b16 %v265
    %v1019 = vunpack.c.l.b16 %v266
    %v1020 = vunpack.c.h.b16 %v266
    %v1021 = vunpack.c.l.b16 %v267
    %v1022 = vunpack.c.h.b16 %v267
    %v1023 = vunpack.c.l.b16 %v268
    %v1024 = vunpack.c.h.b16 %v268
    %v1025 = vunpack.c.l.b16 %v269
    %v1026 = vunpack.c.h.b16 %v269
    %v1027 = vunpack.c.l.b16 %v270
    %v1028 = vunpack.c.h.b16 %v270
    %v1029 = vunpack.c.l.b16 %v271
    %v1030 = vunpack.c.h.b16 %v271
    %v1031 = vunpack.c.l.b16 %v272
    %v1032 = vunpack.c.h.b16 %v272
    %v1033 = vunpack.c.l.b16 %v273
    %v1034 = vunpack.c.h.b16 %v273
    %v1035 = vunpack.c.l.b16 %v274
    %v1036 = vunpack.c.h.b16 %v274
    %v1037 = vunpack.c.l.b16 %v275
    %v1038 = vunpack.c.h.b16 %v275
    %v1039 = vunpack.c.l.b16 %v276
    %v1040 = vunpack.c.h.b16 %v276
    %v1041 = vunpack.c.l.b16 %v277
    %v1042 = vunpack.c.h.b16 %v277
    %v1043 = vunpack.c.l.b16 %v278
    %v1044 = vunpack.c.h.b16 %v278
    %v1045 = vunpack.c.l.b16 %v279
    %v1046 = vunpack.c.h.b16 %v279
    %v1047 = vunpack.c.l.b16 %v280
    %v1048 = vunpack.c.h.b16 %v280
    %v1049 = vunpack.c.l.b16 %v281
    %v1050 = vunpack.c.h.b16 %v281
    %v1051 = vunpack.c.l.b16 %v282
    %v1052 = vunpack.c.h.b16 %v282
    %v1053 = vunpack.c.l.b16 %v283
    %v1054 = vunpack.c.h.b16 %v283
    %v1055 = vunpack.c.l.b16 %v284
    %v1056 = vunpack.c.h.b16 %v284
    %v1057 = vunpack.c.l.b16 %v285
    %v1058 = vunpack.c.h.b16 %v285
    %v1059 = vunpack.c.l.b16 %v286
    %v1060 = vunpack.c.h.b16 %v286
    %v1061 = vunpack.c.l.b16 %v287
    %v1062 = vunpack.c.h.b16 %v287
    %v1063 = vunpack.c.l.b16 %v288
    %v1064 = vunpack.c.h.b16 %v288
    %v1065 = vunpack.c.l.b16 %v289
    %v1066 = vunpack.c.h.b16 %v289
    %v1067 = vunpack.c.l.b16 %v290
    %v1068 = vunpack.c.h.b16 %v290
    %v1069 = vunpack.c.l.b16 %v291
    %v1070 = vunpack.c.h.b16 %v291
    %v1071 = vunpack.c.l.b16 %v292
    %v1072 = vunpack.c.h.b16 %v292
    %v1073 = vunpack.c.l.b16 %v293
    %v1074 = vunpack.c.h.b16 %v293
    %v1075 = vunpack.c.l.b16 %v294
    %v1076 = vunpack.c.h.b16 %v294
    %v1077 = vunpack.c.l.b16 %v295
    %v1078 = vunpack.c.h.b16 %v295
    %v1079 = vunpack.c.l.b16 %v296
    %v1080 = vunpack.c.h.b16 %v296
    %v1081 = vunpack.c.l.b16 %v297
    %v1082 = vunpack.c.h.b16 %v297
    %v1083 = vunpack.c.l.b16 %v298
    %v1084 = vunpack.c.h.b16 %v298
    %v1085 = vunpack.c.l.b16 %v299
    %v1086 = vunpack.c.h.b16 %v299
    %v1087 = vunpack.c.l.b16 %v300
    %v1088 = vunpack.c.h.b16 %v300
    %v1089 = vunpack.c.l.b16 %v301
    %v1090 = vunpack.c.h.b16 %v301
    %v1091 = vunpack.c.l.b16 %v302
    %v1092 = vunpack.c.h.b16 %v302
    %v1093 = vunpack.c.l.b16 %v303
    %v1094 = vunpack.c.h.b16 %v303
    %v1095 = vunpack.c.l.b16 %v304
    %v1096 = vunpack.c.h.b16 %v304
    %v1097 = vunpack.c.l.b16 %v305
    %v1098 = vunpack.c.h.b16 %v305
    %v1099 = vunpack.c.l.b16 %v306
    %v1100 = vunpack.c.h.b16 %v306
    %v1101 = vunpack.c.l.b16 %v307
    %v1102 = vunpack.c.h.b16 %v307
    %v1103 = vunpack.c.l.b16 %v308
    %v1104 = vunpack.c.h.b16 %v308
    %v1105 = vunpack.c.l.b16 %v309
    %v1106 = vunpack.c.h.b16 %v309
    %v1107 = vunpack.c.l.b16 %v310
    %v1108 = vunpack.c.h.b16 %v310
    %v1109 = vunpack.c.l.b16 %v311
    %v1110 = vunpack.c.h.b16 %v311
    %v1111 = vunpack.c.l.b16 %v312
    %v1112 = vunpack.c.h.b16 %v312
    %v1113 = vunpack.c.l.b16 %v313
    %v1114 = vunpack.c.h.b16 %v313
    %v1115 = vunpack.c.l.b16 %v314
    %v1116 = vunpack.c.h.b16 %v314
    %v1117 = vunpack.c.l.b16 %v315
    %v1118 = vunpack.c.h.b16 %v315
    %v1119 = vunpack.c.l.b16 %v316
    %v1120 = vunpack.c.h.b16 %v316
    %v1121 = vunpack.c.l.b16 %v317
    %v1122 = vunpack.c.h.b16 %v317
    %v1123 = vunpack.c.l.b16 %v318
    %v1124 = vunpack.c.h.b16 %v318
    %v1125 = vunpack.c.l.b16 %v319
    %v1126 = vunpack.c.h.b16 %v319
    %v1127 = vunpack.c.l.b16 %v320
    %v1128 = vunpack.c.h.b16 %v320
    %v1129 = vunpack.c.l.b16 %v321
    %v1130 = vunpack.c.h.b16 %v321
    %v1131 = vunpack.c.l.b16 %v322
    %v1132 = vunpack.c.h.b16 %v322
    %v1133 = vunpack.c.l.b16 %v323
    %v1134 = vunpack.c.h.b16 %v323
    %v1135 = vunpack.c.l.b16 %v324
    %v1136 = vunpack.c.h.b16 %v324
    %v1137 = vunpack.c.l.b16 %v325
    %v1138 = vunpack.c.h.b16 %v325
    %v1139 = vunpack.c.l.b16 %v326
    %v1140 = vunpack.c.h.b16 %v326
    %v1141 = vunpack.c.l.b16 %v327
    %v1142 = vunpack.c.h.b16 %v327
    %v1143 = vunpack.c.l.b16 %v328
    %v1144 = vunpack.c.h.b16 %v328
    %v1145 = vunpack.c.l.b16 %v329
    %v1146 = vunpack.c.h.b16 %v329
    %v1147 = vunpack.c.l.b16 %v330
    %v1148 = vunpack.c.h.b16 %v330
    %v1149 = vpack.c.b16 %v641, %v637
    %v1150 = vpack.c.b16 %v642, %v638
    %v1151 = vpack.c.b16 %v643, %v639
    %v1152 = vpack.c.b16 %v644, %v640
    %v1153 = vpack.c.b16 %v649, %v645
    %v1154 = vpack.c.b16 %v650, %v646
    %v1155 = vpack.c.b16 %v651, %v647
    %v1156 = vpack.c.b16 %v652, %v648
    %v1157 = vpack.c.b16 %v657, %v653
    %v1158 = vpack.c.b16 %v658, %v654
    %v1159 = vpack.c.b16 %v659, %v655
    %v1160 = vpack.c.b16 %v660, %v656
    %v1161 = vpack.c.b16 %v665, %v661
    %v1162 = vpack.c.b16 %v666, %v662
    %v1163 = vpack.c.b16 %v667, %v663
    %v1164 = vpack.c.b16 %v668, %v664
    %v1165 = vpack.c.b16 %v673, %v669
    %v1166 = vpack.c.b16 %v674, %v670
    %v1167 = vpack.c.b16 %v675, %v671
    %v1168 = vpack.c.b16 %v676, %v672
    %v1169 = vpack.c.b16 %v681, %v677
    %v1170 = vpack.c.b16 %v682, %v678
    %v1171 = vpack.c.b16 %v683, %v679
    %v1172 = vpack.c.b16 %v684, %v680
    %v1173 = vpack.c.b16 %v689, %v685
    %v1174 = vpack.c.b16 %v690, %v686
    %v1175 = vpack.c.b16 %v691, %v687
    %v1176 = vpack.c.b16 %v692, %v688
    %v1177 = vpack.c.b16 %v697, %v693
    %v1178 = vpack.c.b16 %v698, %v694
    %v1179 = vpack.c.b16 %v699, %v695
    %v1180 = vpack.c.b16 %v700, %v696
    %v1181 = vpack.c.b16 %v705, %v701
    %v1182 = vpack.c.b16 %v706, %v702
    %v1183 = vpack.c.b16 %v707, %v703
    %v1184 = vpack.c.b16 %v708, %v704
    %v1185 = vpack.c.b16 %v713, %v709
    %v1186 = vpack.c.b16 %v714, %v710
    %v1187 = vpack.c.b16 %v715, %v711
    %v1188 = vpack.c.b16 %v716, %v712
    %v1189 = vpack.c.b16 %v721, %v717
    %v1190 = vpack.c.b16 %v722, %v718
    %v1191 = vpack.c.b16 %v723, %v719
    %v1192 = vpack.c.b16 %v724, %v720
    %v1193 = vpack.c.b16 %v729, %v725
    %v1194 = vpack.c.b16 %v730, %v726
    %v1195 = vpack.c.b16 %v731, %v727
    %v1196 = vpack.c.b16 %v732, %v728
    %v1197 = vpack.c.b16 %v737, %v733
    %v1198 = vpack.c.b16 %v738, %v734
    %v1199 = vpack.c.b16 %v739, %v735
    %v1200 = vpack.c.b16 %v740, %v736
    %v1201 = vpack.c.b16 %v745, %v741
    %v1202 = vpack.c.b16 %v746, %v742
    %v1203 = vpack.c.b16 %v747, %v743
    %v1204 = vpack.c.b16 %v748, %v744
    %v1205 = vpack.c.b16 %v753, %v749
    %v1206 = vpack.c.b16 %v754, %v750
    %v1207 = vpack.c.b16 %v755, %v751
    %v1208 = vpack.c.b16 %v756, %v752
    %v1209 = vpack.c.b16 %v761, %v757
    %v1210 = vpack.c.b16 %v762, %v758
    %v1211 = vpack.c.b16 %v763, %v759
    %v1212 = vpack.c.b16 %v764, %v760
    %v1213 = vpack.c.b16 %v769, %v765
    %v1214 = vpack.c.b16 %v770, %v766
    %v1215 = vpack.c.b16 %v771, %v767
    %v1216 = vpack.c.b16 %v772, %v768
    %v1217 = vpack.c.b16 %v777, %v773
    %v1218 = vpack.c.b16 %v778, %v774
    %v1219 = vpack.c.b16 %v779, %v775
    %v1220 = vpack.c.b16 %v780, %v776
    %v1221 = vpack.c.b16 %v785, %v781
    %v1222 = vpack.c.b16 %v786, %v782
    %v1223 = vpack.c.b16 %v787, %v783
    %v1224 = vpack.c.b16 %v788, %v784
    %v1225 = vpack.c.b16 %v793, %v789
    %v1226 = vpack.c.b16 %v794, %v790
    %v1227 = vpack.c.b16 %v795, %v791
    %v1228 = vpack.c.b16 %v796, %v792
    %v1229 = vpack.c.b16 %v801, %v797
    %v1230 = vpack.c.b16 %v802, %v798
    %v1231 = vpack.c.b16 %v803, %v799
    %v1232 = vpack.c.b16 %v804, %v800
    %v1233 = vpack.c.b16 %v809, %v805
    %v1234 = vpack.c.b16 %v810, %v806
    %v1235 = vpack.c.b16 %v811, %v807
    %v1236 = vpack.c.b16 %v812, %v808
    %v1237 = vpack.c.b16 %v817, %v813
    %v1238 = vpack.c.b16 %v818, %v814
    %v1239 = vpack.c.b16 %v819, %v815
    %v1240 = vpack.c.b16 %v820, %v816
    %v1241 = vpack.c.b16 %v825, %v821
    %v1242 = vpack.c.b16 %v826, %v822
    %v1243 = vpack.c.b16 %v827, %v823
    %v1244 = vpack.c.b16 %v828, %v824
    %v1245 = vpack.c.b16 %v833, %v829
    %v1246 = vpack.c.b16 %v834, %v830
    %v1247 = vpack.c.b16 %v835, %v831
    %v1248 = vpack.c.b16 %v836, %v832
    %v1249 = vpack.c.b16 %v841, %v837
    %v1250 = vpack.c.b16 %v842, %v838
    %v1251 = vpack.c.b16 %v843, %v839
    %v1252 = vpack.c.b16 %v844, %v840
    %v1253 = vpack.c.b16 %v849, %v845
    %v1254 = vpack.c.b16 %v850, %v846
    %v1255 = vpack.c.b16 %v851, %v847
    %v1256 = vpack.c.b16 %v852, %v848
    %v1257 = vpack.c.b16 %v857, %v853
    %v1258 = vpack.c.b16 %v858, %v854
    %v1259 = vpack.c.b16 %v859, %v855
    %v1260 = vpack.c.b16 %v860, %v856
    %v1261 = vpack.c.b16 %v865, %v861
    %v1262 = vpack.c.b16 %v866, %v862
    %v1263 = vpack.c.b16 %v867, %v863
    %v1264 = vpack.c.b16 %v868, %v864
    %v1265 = vpack.c.b16 %v873, %v869
    %v1266 = vpack.c.b16 %v874, %v870
    %v1267 = vpack.c.b16 %v875, %v871
    %v1268 = vpack.c.b16 %v876, %v872
    %v1269 = vpack.c.b16 %v881, %v877
    %v1270 = vpack.c.b16 %v882, %v878
    %v1271 = vpack.c.b16 %v883, %v879
    %v1272 = vpack.c.b16 %v884, %v880
    %v1273 = vpack.c.b16 %v889, %v885
    %v1274 = vpack.c.b16 %v890, %v886
    %v1275 = vpack.c.b16 %v891, %v887
    %v1276 = vpack.c.b16 %v892, %v888
    %v1277 = vpack.c.b16 %v897, %v893
    %v1278 = vpack.c.b16 %v898, %v894
    %v1279 = vpack.c.b16 %v899, %v895
    %v1280 = vpack.c.b16 %v900, %v896
    %v1281 = vpack.c.b16 %v905, %v901
    %v1282 = vpack.c.b16 %v906, %v902
    %v1283 = vpack.c.b16 %v907, %v903
    %v1284 = vpack.c.b16 %v908, %v904
    %v1285 = vpack.c.b16 %v913, %v909
    %v1286 = vpack.c.b16 %v914, %v910
    %v1287 = vpack.c.b16 %v915, %v911
    %v1288 = vpack.c.b16 %v916, %v912
    %v1289 = vpack.c.b16 %v921, %v917
    %v1290 = vpack.c.b16 %v922, %v918
    %v1291 = vpack.c.b16 %v923, %v919
    %v1292 = vpack.c.b16 %v924, %v920
    %v1293 = vpack.c.b16 %v929, %v925
    %v1294 = vpack.c.b16 %v930, %v926
    %v1295 = vpack.c.b16 %v931, %v927
    %v1296 = vpack.c.b16 %v932, %v928
    %v1297 = vpack.c.b16 %v937, %v933
    %v1298 = vpack.c.b16 %v938, %v934
    %v1299 = vpack.c.b16 %v939, %v935
    %v1300 = vpack.c.b16 %v940, %v936
    %v1301 = vpack.c.b16 %v945, %v941
    %v1302 = vpack.c.b16 %v946, %v942
    %v1303 = vpack.c.b16 %v947, %v943
    %v1304 = vpack.c.b16 %v948, %v944
    %v1305 = vpack.c.b16 %v953, %v949
    %v1306 = vpack.c.b16 %v954, %v950
    %v1307 = vpack.c.b16 %v955, %v951
    %v1308 = vpack.c.b16 %v956, %v952
    %v1309 = vpack.c.b16 %v961, %v957
    %v1310 = vpack.c.b16 %v962, %v958
    %v1311 = vpack.c.b16 %v963, %v959
    %v1312 = vpack.c.b16 %v964, %v960
    %v1313 = vpack.c.b16 %v969, %v965
    %v1314 = vpack.c.b16 %v970, %v966
    %v1315 = vpack.c.b16 %v971, %v967
    %v1316 = vpack.c.b16 %v972, %v968
    %v1317 = vpack.c.b16 %v977, %v973
    %v1318 = vpack.c.b16 %v978, %v974
    %v1319 = vpack.c.b16 %v979, %v975
    %v1320 = vpack.c.b16 %v980, %v976
    %v1321 = vpack.c.b16 %v985, %v981
    %v1322 = vpack.c.b16 %v986, %v982
    %v1323 = vpack.c.b16 %v987, %v983
    %v1324 = vpack.c.b16 %v988, %v984
    %v1325 = vpack.c.b16 %v993, %v989
    %v1326 = vpack.c.b16 %v994, %v990
    %v1327 = vpack.c.b16 %v995, %v991
    %v1328 = vpack.c.b16 %v996, %v992
    %v1329 = vpack.c.b16 %v1001, %v997
    %v1330 = vpack.c.b16 %v1002, %v998
    %v1331 = vpack.c.b16 %v1003, %v999
    %v1332 = vpack.c.b16 %v1004, %v1000
    %v1333 = vpack.c.b16 %v1009, %v1005
    %v1334 = vpack.c.b16 %v1010, %v1006
    %v1335 = vpack.c.b16 %v1011, %v1007
    %v1336 = vpack.c.b16 %v1012, %v1008
    %v1337 = vpack.c.b16 %v1017, %v1013
    %v1338 = vpack.c.b16 %v1018, %v1014
    %v1339 = vpack.c.b16 %v1019, %v1015
    %v1340 = vpack.c.b16 %v1020, %v1016
    %v1341 = vpack.c.b16 %v1025, %v1021
    %v1342 = vpack.c.b16 %v1026, %v1022
    %v1343 = vpack.c.b16 %v1027, %v1023
    %v1344 = vpack.c.b16 %v1028, %v1024
    %v1345 = vpack.c.b16 %v1033, %v1029
    %v1346 = vpack.c.b16 %v1034, %v1030
    %v1347 = vpack.c.b16 %v1035, %v1031
    %v1348 = vpack.c.b16 %v1036, %v1032
    %v1349 = vpack.c.b16 %v1041, %v1037
    %v1350 = vpack.c.b16 %v1042, %v1038
    %v1351 = vpack.c.b16 %v1043, %v1039
    %v1352 = vpack.c.b16 %v1044, %v1040
    %v1353 = vpack.c.b16 %v1049, %v1045
    %v1354 = vpack.c.b16 %v1050, %v1046
    %v1355 = vpack.c.b16 %v1051, %v1047
    %v1356 = vpack.c.b16 %v1052, %v1048
    %v1357 = vpack.c.b16 %v1057, %v1053
    %v1358 = vpack.c.b16 %v1058, %v1054
    %v1359 = vpack.c.b16 %v1059, %v1055
    %v1360 = vpack.c.b16 %v1060, %v1056
    %v1361 = vpack.c.b16 %v1065, %v1061
    %v1362 = vpack.c.b16 %v1066, %v1062
    %v1363 = vpack.c.b16 %v1067, %v1063
    %v1364 = vpack.c.b16 %v1068, %v1064
    %v1365 = vpack.c.b16 %v1073, %v1069
    %v1366 = vpack.c.b16 %v1074, %v1070
    %v1367 = vpack.c.b16 %v1075, %v1071
    %v1368 = vpack.c.b16 %v1076, %v1072
    %v1369 = vpack.c.b16 %v1081, %v1077
    %v1370 = vpack.c.b16 %v1082, %v1078
    %v1371 = vpack.c.b16 %v1083, %v1079
    %v1372 = vpack.c.b16 %v1084, %v1080
    %v1373 = vpack.c.b16 %v1089, %v1085
    %v1374 = vpack.c.b16 %v1090, %v1086
    %v1375 = vpack.c.b16 %v1091, %v1087
    %v1376 = vpack.c.b16 %v1092, %v1088
    %v1377 = vpack.c.b16 %v1097, %v1093
    %v1378 = vpack.c.b16 %v1098, %v1094
    %v1379 = vpack.c.b16 %v1099, %v1095
    %v1380 = vpack.c.b16 %v1100, %v1096
    %v1381 = vpack.c.b16 %v1105, %v1101
    %v1382 = vpack.c.b16 %v1106, %v1102
    %v1383 = vpack.c.b16 %v1107, %v1103
    %v1384 = vpack.c.b16 %v1108, %v1104
    %v1385 = vpack.c.b16 %v1113, %v1109
    %v1386 = vpack.c.b16 %v1114, %v1110
    %v1387 = vpack.c.b16 %v1115, %v1111
    %v1388 = vpack.c.b16 %v1116, %v1112
    %v1389 = vpack.c.b16 %v1121, %v1117
    %v1390 = vpack.c.b16 %v1122, %v1118
    %v1391 = vpack.c.b16 %v1123, %v1119
    %v1392 = vpack.c.b16 %v1124, %v1120
    %v1393 = vpack.c.b16 %v1129, %v1125
    %v1394 = vpack.c.b16 %v1130, %v1126
    %v1395 = vpack.c.b16 %v1131, %v1127
    %v1396 = vpack.c.b16 %v1132, %v1128
    %v1397 = vpack.c.b16 %v1137, %v1133
    %v1398 = vpack.c.b16 %v1138, %v1134
    %v1399 = vpack.c.b16 %v1139, %v1135
    %v1400 = vpack.c.b16 %v1140, %v1136
    %v1401 = vpack.c.b16 %v1145, %v1141
    %v1402 = vpack.c.b16 %v1146, %v1142
    %v1403 = vpack.c.b16 %v1147, %v1143
    %v1404 = vpack.c.b16 %v1148, %v1144
    %1661 = vmatpush.bf16.msra.mxu0 %v1177
    %1662 = vmatpush.bf16.msra.mxu0 %v1173
    %1663 = vmatpush.bf16.msra.mxu0 %v1169
    %1664 = vmatpush.bf16.msra.mxu0 %v1165
    %1665 = vmatpush.bf16.msra.mxu0 %v1161
    %1666 = vmatpush.bf16.msra.mxu0 %v1157
    %1667 = vmatpush.bf16.msra.mxu0 %v1153
    %1668 = vmatpush.bf16.msra.mxu0 %v1149
    %1669 = vmatmul.bf16.gmra.mxu0 %v365
    %v1670 = vpop.f32.mrf.mxu0
    %v1671 = vadd.f32 %v333, %v1670
    %v1672 = vpop.f32.mrf.mxu0
    %v1673 = vadd.f32 %v333, %v1672
    %1674 = vdwg.mxu0
    %1675 = vmatpush.bf16.msra.mxu0 %v1209
    %1676 = vmatpush.bf16.msra.mxu0 %v1205
    %1677 = vmatpush.bf16.msra.mxu0 %v1201
    %1678 = vmatpush.bf16.msra.mxu0 %v1197
    %1679 = vmatpush.bf16.msra.mxu0 %v1193
    %1680 = vmatpush.bf16.msra.mxu0 %v1189
    %1681 = vmatpush.bf16.msra.mxu0 %v1185
    %1682 = vmatpush.bf16.msra.mxu0 %v1181
    %1683 = vmatmul.bf16.gmra.mxu0 %v366
    %v1684 = vpop.f32.mrf.mxu0
    %v1685 = vadd.f32 %v1671, %v1684
    %v1686 = vpop.f32.mrf.mxu0
    %v1687 = vadd.f32 %v1673, %v1686
    %1688 = vdwg.mxu0
    %1689 = vmatpush.bf16.msra.mxu0 %v1241
    %1690 = vmatpush.bf16.msra.mxu0 %v1237
    %1691 = vmatpush.bf16.msra.mxu0 %v1233
    %1692 = vmatpush.bf16.msra.mxu0 %v1229
    %1693 = vmatpush.bf16.msra.mxu0 %v1225
    %1694 = vmatpush.bf16.msra.mxu0 %v1221
    %1695 = vmatpush.bf16.msra.mxu0 %v1217
    %1696 = vmatpush.bf16.msra.mxu0 %v1213
    %1697 = vmatmul.bf16.gmra.mxu0 %v367
    %v1698 = vpop.f32.mrf.mxu0
    %v1699 = vadd.f32 %v1685, %v1698
    %v1700 = vpop.f32.mrf.mxu0
    %v1701 = vadd.f32 %v1687, %v1700
    %1702 = vdwg.mxu0
    %1703 = vmatpush.bf16.msra.mxu0 %v1273
    %1704 = vmatpush.bf16.msra.mxu0 %v1269
    %1705 = vmatpush.bf16.msra.mxu0 %v1265
    %1706 = vmatpush.bf16.msra.mxu0 %v1261
    %1707 = vmatpush.bf16.msra.mxu0 %v1257
    %1708 = vmatpush.bf16.msra.mxu0 %v1253
    %1709 = vmatpush.bf16.msra.mxu0 %v1249
    %1710 = vmatpush.bf16.msra.mxu0 %v1245
    %1711 = vmatmul.bf16.gmra.mxu0 %v368
    %v1712 = vpop.f32.mrf.mxu0
    %v1713 = vadd.f32 %v1699, %v1712
    %v1714 = vpop.f32.mrf.mxu0
    %v1715 = vadd.f32 %v1701, %v1714
    %1716 = vdwg.mxu0
    %1717 = vmatpush.bf16.msra.mxu0 %v1305
    %1718 = vmatpush.bf16.msra.mxu0 %v1301
    %1719 = vmatpush.bf16.msra.mxu0 %v1297
    %1720 = vmatpush.bf16.msra.mxu0 %v1293
    %1721 = vmatpush.bf16.msra.mxu0 %v1289
    %1722 = vmatpush.bf16.msra.mxu0 %v1285
    %1723 = vmatpush.bf16.msra.mxu0 %v1281
    %1724 = vmatpush.bf16.msra.mxu0 %v1277
    %1725 = vmatmul.bf16.gmra.mxu0 %v369
    %v1726 = vpop.f32.mrf.mxu0
    %v1727 = vadd.f32 %v1713, %v1726
    %v1728 = vpop.f32.mrf.mxu0
    %v1729 = vadd.f32 %v1715, %v1728
    %1730 = vdwg.mxu0
    %1731 = vmatpush.bf16.msra.mxu0 %v1337
    %1732 = vmatpush.bf16.msra.mxu0 %v1333
    %1733 = vmatpush.bf16.msra.mxu0 %v1329
    %1734 = vmatpush.bf16.msra.mxu0 %v1325
    %1735 = vmatpush.bf16.msra.mxu0 %v1321
    %1736 = vmatpush.bf16.msra.mxu0 %v1317
    %1737 = vmatpush.bf16.msra.mxu0 %v1313
    %1738 = vmatpush.bf16.msra.mxu0 %v1309
    %1739 = vmatmul.bf16.gmra.mxu0 %v370
    %v1740 = vpop.f32.mrf.mxu0
    %v1741 = vadd.f32 %v1727, %v1740
    %v1742 = vpop.f32.mrf.mxu0
    %v1743 = vadd.f32 %v1729, %v1742
    %1744 = vdwg.mxu0
    %1745 = vmatpush.bf16.msra.mxu0 %v1369
    %1746 = vmatpush.bf16.msra.mxu0 %v1365
    %1747 = vmatpush.bf16.msra.mxu0 %v1361
    %1748 = vmatpush.bf16.msra.mxu0 %v1357
    %1749 = vmatpush.bf16.msra.mxu0 %v1353
    %1750 = vmatpush.bf16.msra.mxu0 %v1349
    %1751 = vmatpush.bf16.msra.mxu0 %v1345
    %1752 = vmatpush.bf16.msra.mxu0 %v1341
    %1753 = vmatmul.bf16.gmra.mxu0 %v371
    %v1754 = vpop.f32.mrf.mxu0
    %v1755 = vadd.f32 %v1741, %v1754
    %v1756 = vpop.f32.mrf.mxu0
    %v1757 = vadd.f32 %v1743, %v1756
    %1758 = vdwg.mxu0
    %1759 = vmatpush.bf16.msra.mxu0 %v1401
    %1760 = vmatpush.bf16.msra.mxu0 %v1397
    %1761 = vmatpush.bf16.msra.mxu0 %v1393
    %1762 = vmatpush.bf16.msra.mxu0 %v1389
    %1763 = vmatpush.bf16.msra.mxu0 %v1385
    %1764 = vmatpush.bf16.msra.mxu0 %v1381
    %1765 = vmatpush.bf16.msra.mxu0 %v1377
    %1766 = vmatpush.bf16.msra.mxu0 %v1373
    %1767 = vmatmul.bf16.gmra.mxu0 %v372
    %v1768 = vpop.f32.mrf.mxu0
    %v1769 = vadd.f32 %v1755, %v1768
    %v1770 = vpop.f32.mrf.mxu0
    %v1771 = vadd.f32 %v1757, %v1770
    %1772 = vdwg.mxu0
    %1773 = vmatpush.bf16.msra.mxu0 %v1178
    %1774 = vmatpush.bf16.msra.mxu0 %v1174
    %1775 = vmatpush.bf16.msra.mxu0 %v1170
    %1776 = vmatpush.bf16.msra.mxu0 %v1166
    %1777 = vmatpush.bf16.msra.mxu0 %v1162
    %1778 = vmatpush.bf16.msra.mxu0 %v1158
    %1779 = vmatpush.bf16.msra.mxu0 %v1154
    %1780 = vmatpush.bf16.msra.mxu0 %v1150
    %1781 = vmatmul.bf16.gmra.mxu0 %v365
    %v1782 = vpop.f32.mrf.mxu0
    %v1783 = vadd.f32 %v334, %v1782
    %v1784 = vpop.f32.mrf.mxu0
    %v1785 = vadd.f32 %v334, %v1784
    %1786 = vdwg.mxu0
    %1787 = vmatpush.bf16.msra.mxu0 %v1210
    %1788 = vmatpush.bf16.msra.mxu0 %v1206
    %1789 = vmatpush.bf16.msra.mxu0 %v1202
    %1790 = vmatpush.bf16.msra.mxu0 %v1198
    %1791 = vmatpush.bf16.msra.mxu0 %v1194
    %1792 = vmatpush.bf16.msra.mxu0 %v1190
    %1793 = vmatpush.bf16.msra.mxu0 %v1186
    %1794 = vmatpush.bf16.msra.mxu0 %v1182
    %1795 = vmatmul.bf16.gmra.mxu0 %v366
    %v1796 = vpop.f32.mrf.mxu0
    %v1797 = vadd.f32 %v1783, %v1796
    %v1798 = vpop.f32.mrf.mxu0
    %v1799 = vadd.f32 %v1785, %v1798
    %1800 = vdwg.mxu0
    %1801 = vmatpush.bf16.msra.mxu0 %v1242
    %1802 = vmatpush.bf16.msra.mxu0 %v1238
    %1803 = vmatpush.bf16.msra.mxu0 %v1234
    %1804 = vmatpush.bf16.msra.mxu0 %v1230
    %1805 = vmatpush.bf16.msra.mxu0 %v1226
    %1806 = vmatpush.bf16.msra.mxu0 %v1222
    %1807 = vmatpush.bf16.msra.mxu0 %v1218
    %1808 = vmatpush.bf16.msra.mxu0 %v1214
    %1809 = vmatmul.bf16.gmra.mxu0 %v367
    %v1810 = vpop.f32.mrf.mxu0
    %v1811 = vadd.f32 %v1797, %v1810
    %v1812 = vpop.f32.mrf.mxu0
    %v1813 = vadd.f32 %v1799, %v1812
    %1814 = vdwg.mxu0
    %1815 = vmatpush.bf16.msra.mxu0 %v1274
    %1816 = vmatpush.bf16.msra.mxu0 %v1270
    %1817 = vmatpush.bf16.msra.mxu0 %v1266
    %1818 = vmatpush.bf16.msra.mxu0 %v1262
    %1819 = vmatpush.bf16.msra.mxu0 %v1258
    %1820 = vmatpush.bf16.msra.mxu0 %v1254
    %1821 = vmatpush.bf16.msra.mxu0 %v1250
    %1822 = vmatpush.bf16.msra.mxu0 %v1246
    %1823 = vmatmul.bf16.gmra.mxu0 %v368
    %v1824 = vpop.f32.mrf.mxu0
    %v1825 = vadd.f32 %v1811, %v1824
    %v1826 = vpop.f32.mrf.mxu0
    %v1827 = vadd.f32 %v1813, %v1826
    %1828 = vdwg.mxu0
    %1829 = vmatpush.bf16.msra.mxu0 %v1306
    %1830 = vmatpush.bf16.msra.mxu0 %v1302
    %1831 = vmatpush.bf16.msra.mxu0 %v1298
    %1832 = vmatpush.bf16.msra.mxu0 %v1294
    %1833 = vmatpush.bf16.msra.mxu0 %v1290
    %1834 = vmatpush.bf16.msra.mxu0 %v1286
    %1835 = vmatpush.bf16.msra.mxu0 %v1282
    %1836 = vmatpush.bf16.msra.mxu0 %v1278
    %1837 = vmatmul.bf16.gmra.mxu0 %v369
    %v1838 = vpop.f32.mrf.mxu0
    %v1839 = vadd.f32 %v1825, %v1838
    %v1840 = vpop.f32.mrf.mxu0
    %v1841 = vadd.f32 %v1827, %v1840
    %1842 = vdwg.mxu0
    %1843 = vmatpush.bf16.msra.mxu0 %v1338
    %1844 = vmatpush.bf16.msra.mxu0 %v1334
    %1845 = vmatpush.bf16.msra.mxu0 %v1330
    %1846 = vmatpush.bf16.msra.mxu0 %v1326
    %1847 = vmatpush.bf16.msra.mxu0 %v1322
    %1848 = vmatpush.bf16.msra.mxu0 %v1318
    %1849 = vmatpush.bf16.msra.mxu0 %v1314
    %1850 = vmatpush.bf16.msra.mxu0 %v1310
    %1851 = vmatmul.bf16.gmra.mxu0 %v370
    %v1852 = vpop.f32.mrf.mxu0
    %v1853 = vadd.f32 %v1839, %v1852
    %v1854 = vpop.f32.mrf.mxu0
    %v1855 = vadd.f32 %v1841, %v1854
    %1856 = vdwg.mxu0
    %1857 = vmatpush.bf16.msra.mxu0 %v1370
    %1858 = vmatpush.bf16.msra.mxu0 %v1366
    %1859 = vmatpush.bf16.msra.mxu0 %v1362
    %1860 = vmatpush.bf16.msra.mxu0 %v1358
    %1861 = vmatpush.bf16.msra.mxu0 %v1354
    %1862 = vmatpush.bf16.msra.mxu0 %v1350
    %1863 = vmatpush.bf16.msra.mxu0 %v1346
    %1864 = vmatpush.bf16.msra.mxu0 %v1342
    %1865 = vmatmul.bf16.gmra.mxu0 %v371
    %v1866 = vpop.f32.mrf.mxu0
    %v1867 = vadd.f32 %v1853, %v1866
    %v1868 = vpop.f32.mrf.mxu0
    %v1869 = vadd.f32 %v1855, %v1868
    %1870 = vdwg.mxu0
    %1871 = vmatpush.bf16.msra.mxu0 %v1402
    %1872 = vmatpush.bf16.msra.mxu0 %v1398
    %1873 = vmatpush.bf16.msra.mxu0 %v1394
    %1874 = vmatpush.bf16.msra.mxu0 %v1390
    %1875 = vmatpush.bf16.msra.mxu0 %v1386
    %1876 = vmatpush.bf16.msra.mxu0 %v1382
    %1877 = vmatpush.bf16.msra.mxu0 %v1378
    %1878 = vmatpush.bf16.msra.mxu0 %v1374
    %1879 = vmatmul.bf16.gmra.mxu0 %v372
    %v1880 = vpop.f32.mrf.mxu0
    %v1881 = vadd.f32 %v1867, %v1880
    %v1882 = vpop.f32.mrf.mxu0
    %v1883 = vadd.f32 %v1869, %v1882
    %1884 = vdwg.mxu0
    %1885 = vmatpush.bf16.msra.mxu0 %v1179
    %1886 = vmatpush.bf16.msra.mxu0 %v1175
    %1887 = vmatpush.bf16.msra.mxu0 %v1171
    %1888 = vmatpush.bf16.msra.mxu0 %v1167
    %1889 = vmatpush.bf16.msra.mxu0 %v1163
    %1890 = vmatpush.bf16.msra.mxu0 %v1159
    %1891 = vmatpush.bf16.msra.mxu0 %v1155
    %1892 = vmatpush.bf16.msra.mxu0 %v1151
    %1893 = vmatmul.bf16.gmra.mxu0 %v365
    %v1894 = vpop.f32.mrf.mxu0
    %v1895 = vadd.f32 %v335, %v1894
    %v1896 = vpop.f32.mrf.mxu0
    %v1897 = vadd.f32 %v335, %v1896
    %1898 = vdwg.mxu0
    %1899 = vmatpush.bf16.msra.mxu0 %v1211
    %1900 = vmatpush.bf16.msra.mxu0 %v1207
    %1901 = vmatpush.bf16.msra.mxu0 %v1203
    %1902 = vmatpush.bf16.msra.mxu0 %v1199
    %1903 = vmatpush.bf16.msra.mxu0 %v1195
    %1904 = vmatpush.bf16.msra.mxu0 %v1191
    %1905 = vmatpush.bf16.msra.mxu0 %v1187
    %1906 = vmatpush.bf16.msra.mxu0 %v1183
    %1907 = vmatmul.bf16.gmra.mxu0 %v366
    %v1908 = vpop.f32.mrf.mxu0
    %v1909 = vadd.f32 %v1895, %v1908
    %v1910 = vpop.f32.mrf.mxu0
    %v1911 = vadd.f32 %v1897, %v1910
    %1912 = vdwg.mxu0
    %1913 = vmatpush.bf16.msra.mxu0 %v1243
    %1914 = vmatpush.bf16.msra.mxu0 %v1239
    %1915 = vmatpush.bf16.msra.mxu0 %v1235
    %1916 = vmatpush.bf16.msra.mxu0 %v1231
    %1917 = vmatpush.bf16.msra.mxu0 %v1227
    %1918 = vmatpush.bf16.msra.mxu0 %v1223
    %1919 = vmatpush.bf16.msra.mxu0 %v1219
    %1920 = vmatpush.bf16.msra.mxu0 %v1215
    %1921 = vmatmul.bf16.gmra.mxu0 %v367
    %v1922 = vpop.f32.mrf.mxu0
    %v1923 = vadd.f32 %v1909, %v1922
    %v1924 = vpop.f32.mrf.mxu0
    %v1925 = vadd.f32 %v1911, %v1924
    %1926 = vdwg.mxu0
    %1927 = vmatpush.bf16.msra.mxu0 %v1275
    %1928 = vmatpush.bf16.msra.mxu0 %v1271
    %1929 = vmatpush.bf16.msra.mxu0 %v1267
    %1930 = vmatpush.bf16.msra.mxu0 %v1263
    %1931 = vmatpush.bf16.msra.mxu0 %v1259
    %1932 = vmatpush.bf16.msra.mxu0 %v1255
    %1933 = vmatpush.bf16.msra.mxu0 %v1251
    %1934 = vmatpush.bf16.msra.mxu0 %v1247
    %1935 = vmatmul.bf16.gmra.mxu0 %v368
    %v1936 = vpop.f32.mrf.mxu0
    %v1937 = vadd.f32 %v1923, %v1936
    %v1938 = vpop.f32.mrf.mxu0
    %v1939 = vadd.f32 %v1925, %v1938
    %1940 = vdwg.mxu0
    %1941 = vmatpush.bf16.msra.mxu0 %v1307
    %1942 = vmatpush.bf16.msra.mxu0 %v1303
    %1943 = vmatpush.bf16.msra.mxu0 %v1299
    %1944 = vmatpush.bf16.msra.mxu0 %v1295
    %1945 = vmatpush.bf16.msra.mxu0 %v1291
    %1946 = vmatpush.bf16.msra.mxu0 %v1287
    %1947 = vmatpush.bf16.msra.mxu0 %v1283
    %1948 = vmatpush.bf16.msra.mxu0 %v1279
    %1949 = vmatmul.bf16.gmra.mxu0 %v369
    %v1950 = vpop.f32.mrf.mxu0
    %v1951 = vadd.f32 %v1937, %v1950
    %v1952 = vpop.f32.mrf.mxu0
    %v1953 = vadd.f32 %v1939, %v1952
    %1954 = vdwg.mxu0
    %1955 = vmatpush.bf16.msra.mxu0 %v1339
    %1956 = vmatpush.bf16.msra.mxu0 %v1335
    %1957 = vmatpush.bf16.msra.mxu0 %v1331
    %1958 = vmatpush.bf16.msra.mxu0 %v1327
    %1959 = vmatpush.bf16.msra.mxu0 %v1323
    %1960 = vmatpush.bf16.msra.mxu0 %v1319
    %1961 = vmatpush.bf16.msra.mxu0 %v1315
    %1962 = vmatpush.bf16.msra.mxu0 %v1311
    %1963 = vmatmul.bf16.gmra.mxu0 %v370
    %v1964 = vpop.f32.mrf.mxu0
    %v1965 = vadd.f32 %v1951, %v1964
    %v1966 = vpop.f32.mrf.mxu0
    %v1967 = vadd.f32 %v1953, %v1966
    %1968 = vdwg.mxu0
    %1969 = vmatpush.bf16.msra.mxu0 %v1371
    %1970 = vmatpush.bf16.msra.mxu0 %v1367
    %1971 = vmatpush.bf16.msra.mxu0 %v1363
    %1972 = vmatpush.bf16.msra.mxu0 %v1359
    %1973 = vmatpush.bf16.msra.mxu0 %v1355
    %1974 = vmatpush.bf16.msra.mxu0 %v1351
    %1975 = vmatpush.bf16.msra.mxu0 %v1347
    %1976 = vmatpush.bf16.msra.mxu0 %v1343
    %1977 = vmatmul.bf16.gmra.mxu0 %v371
    %v1978 = vpop.f32.mrf.mxu0
    %v1979 = vadd.f32 %v1965, %v1978
    %v1980 = vpop.f32.mrf.mxu0
    %v1981 = vadd.f32 %v1967, %v1980
    %1982 = vdwg.mxu0
    %1983 = vmatpush.bf16.msra.mxu0 %v1403
    %1984 = vmatpush.bf16.msra.mxu0 %v1399
    %1985 = vmatpush.bf16.msra.mxu0 %v1395
    %1986 = vmatpush.bf16.msra.mxu0 %v1391
    %1987 = vmatpush.bf16.msra.mxu0 %v1387
    %1988 = vmatpush.bf16.msra.mxu0 %v1383
    %1989 = vmatpush.bf16.msra.mxu0 %v1379
    %1990 = vmatpush.bf16.msra.mxu0 %v1375
    %1991 = vmatmul.bf16.gmra.mxu0 %v372
    %v1992 = vpop.f32.mrf.mxu0
    %v1993 = vadd.f32 %v1979, %v1992
    %v1994 = vpop.f32.mrf.mxu0
    %v1995 = vadd.f32 %v1981, %v1994
    %1996 = vdwg.mxu0
    %1997 = vmatpush.bf16.msra.mxu0 %v1180
    %1998 = vmatpush.bf16.msra.mxu0 %v1176
    %1999 = vmatpush.bf16.msra.mxu0 %v1172
    %2000 = vmatpush.bf16.msra.mxu0 %v1168
    %2001 = vmatpush.bf16.msra.mxu0 %v1164
    %2002 = vmatpush.bf16.msra.mxu0 %v1160
    %2003 = vmatpush.bf16.msra.mxu0 %v1156
    %2004 = vmatpush.bf16.msra.mxu0 %v1152
    %2005 = vmatmul.bf16.gmra.mxu0 %v365
    %v2006 = vpop.f32.mrf.mxu0
    %v2007 = vadd.f32 %v336, %v2006
    %v2008 = vpop.f32.mrf.mxu0
    %v2009 = vadd.f32 %v336, %v2008
    %2010 = vdwg.mxu0
    %2011 = vmatpush.bf16.msra.mxu0 %v1212
    %2012 = vmatpush.bf16.msra.mxu0 %v1208
    %2013 = vmatpush.bf16.msra.mxu0 %v1204
    %2014 = vmatpush.bf16.msra.mxu0 %v1200
    %2015 = vmatpush.bf16.msra.mxu0 %v1196
    %2016 = vmatpush.bf16.msra.mxu0 %v1192
    %2017 = vmatpush.bf16.msra.mxu0 %v1188
    %2018 = vmatpush.bf16.msra.mxu0 %v1184
    %2019 = vmatmul.bf16.gmra.mxu0 %v366
    %v2020 = vpop.f32.mrf.mxu0
    %v2021 = vadd.f32 %v2007, %v2020
    %v2022 = vpop.f32.mrf.mxu0
    %v2023 = vadd.f32 %v2009, %v2022
    %2024 = vdwg.mxu0
    %2025 = vmatpush.bf16.msra.mxu0 %v1244
    %2026 = vmatpush.bf16.msra.mxu0 %v1240
    %2027 = vmatpush.bf16.msra.mxu0 %v1236
    %2028 = vmatpush.bf16.msra.mxu0 %v1232
    %2029 = vmatpush.bf16.msra.mxu0 %v1228
    %2030 = vmatpush.bf16.msra.mxu0 %v1224
    %2031 = vmatpush.bf16.msra.mxu0 %v1220
    %2032 = vmatpush.bf16.msra.mxu0 %v1216
    %2033 = vmatmul.bf16.gmra.mxu0 %v367
    %v2034 = vpop.f32.mrf.mxu0
    %v2035 = vadd.f32 %v2021, %v2034
    %v2036 = vpop.f32.mrf.mxu0
    %v2037 = vadd.f32 %v2023, %v2036
    %2038 = vdwg.mxu0
    %2039 = vmatpush.bf16.msra.mxu0 %v1276
    %2040 = vmatpush.bf16.msra.mxu0 %v1272
    %2041 = vmatpush.bf16.msra.mxu0 %v1268
    %2042 = vmatpush.bf16.msra.mxu0 %v1264
    %2043 = vmatpush.bf16.msra.mxu0 %v1260
    %2044 = vmatpush.bf16.msra.mxu0 %v1256
    %2045 = vmatpush.bf16.msra.mxu0 %v1252
    %2046 = vmatpush.bf16.msra.mxu0 %v1248
    %2047 = vmatmul.bf16.gmra.mxu0 %v368
    %v2048 = vpop.f32.mrf.mxu0
    %v2049 = vadd.f32 %v2035, %v2048
    %v2050 = vpop.f32.mrf.mxu0
    %v2051 = vadd.f32 %v2037, %v2050
    %2052 = vdwg.mxu0
    %2053 = vmatpush.bf16.msra.mxu0 %v1308
    %2054 = vmatpush.bf16.msra.mxu0 %v1304
    %2055 = vmatpush.bf16.msra.mxu0 %v1300
    %2056 = vmatpush.bf16.msra.mxu0 %v1296
    %2057 = vmatpush.bf16.msra.mxu0 %v1292
    %2058 = vmatpush.bf16.msra.mxu0 %v1288
    %2059 = vmatpush.bf16.msra.mxu0 %v1284
    %2060 = vmatpush.bf16.msra.mxu0 %v1280
    %2061 = vmatmul.bf16.gmra.mxu0 %v369
    %v2062 = vpop.f32.mrf.mxu0
    %v2063 = vadd.f32 %v2049, %v2062
    %v2064 = vpop.f32.mrf.mxu0
    %v2065 = vadd.f32 %v2051, %v2064
    %2066 = vdwg.mxu0
    %2067 = vmatpush.bf16.msra.mxu0 %v1340
    %2068 = vmatpush.bf16.msra.mxu0 %v1336
    %2069 = vmatpush.bf16.msra.mxu0 %v1332
    %2070 = vmatpush.bf16.msra.mxu0 %v1328
    %2071 = vmatpush.bf16.msra.mxu0 %v1324
    %2072 = vmatpush.bf16.msra.mxu0 %v1320
    %2073 = vmatpush.bf16.msra.mxu0 %v1316
    %2074 = vmatpush.bf16.msra.mxu0 %v1312
    %2075 = vmatmul.bf16.gmra.mxu0 %v370
    %v2076 = vpop.f32.mrf.mxu0
    %v2077 = vadd.f32 %v2063, %v2076
    %v2078 = vpop.f32.mrf.mxu0
    %v2079 = vadd.f32 %v2065, %v2078
    %2080 = vdwg.mxu0
    %2081 = vmatpush.bf16.msra.mxu0 %v1372
    %2082 = vmatpush.bf16.msra.mxu0 %v1368
    %2083 = vmatpush.bf16.msra.mxu0 %v1364
    %2084 = vmatpush.bf16.msra.mxu0 %v1360
    %2085 = vmatpush.bf16.msra.mxu0 %v1356
    %2086 = vmatpush.bf16.msra.mxu0 %v1352
    %2087 = vmatpush.bf16.msra.mxu0 %v1348
    %2088 = vmatpush.bf16.msra.mxu0 %v1344
    %2089 = vmatmul.bf16.gmra.mxu0 %v371
    %v2090 = vpop.f32.mrf.mxu0
    %v2091 = vadd.f32 %v2077, %v2090
    %v2092 = vpop.f32.mrf.mxu0
    %v2093 = vadd.f32 %v2079, %v2092
    %2094 = vdwg.mxu0
    %2095 = vmatpush.bf16.msra.mxu0 %v1404
    %2096 = vmatpush.bf16.msra.mxu0 %v1400
    %2097 = vmatpush.bf16.msra.mxu0 %v1396
    %2098 = vmatpush.bf16.msra.mxu0 %v1392
    %2099 = vmatpush.bf16.msra.mxu0 %v1388
    %2100 = vmatpush.bf16.msra.mxu0 %v1384
    %2101 = vmatpush.bf16.msra.mxu0 %v1380
    %2102 = vmatpush.bf16.msra.mxu0 %v1376
    %2103 = vmatmul.bf16.gmra.mxu0 %v372
    %v2104 = vpop.f32.mrf.mxu0
    %v2105 = vadd.f32 %v2091, %v2104
    %v2106 = vpop.f32.mrf.mxu0
    %v2107 = vadd.f32 %v2093, %v2106
    %2108 = vdwg.mxu0
    %v2109 = vmul.f32 %v1769, 0.5
    %v2110 = vmul.f32 %v1881, 0.5
    %v2111 = vmul.f32 %v1993, 0.5
    %v2112 = vmul.f32 %v2105, 0.5
    %v2113 = vmul.f32 %v1771, 0.5
    %v2114 = vmul.f32 %v1883, 0.5
    %v2115 = vmul.f32 %v1995, 0.5
    %v2116 = vmul.f32 %v2107, 0.5
    %v2117 = vmul.f32 %v1769, 0.70710677
    %v2118 = vmul.f32 %v1881, 0.70710677
    %v2119 = vmul.f32 %v1993, 0.70710677
    %v2120 = vmul.f32 %v2105, 0.70710677
    %v2121 = vmul.f32 %v1771, 0.70710677
    %v2122 = vmul.f32 %v1883, 0.70710677
    %v2123 = vmul.f32 %v1995, 0.70710677
    %v2124 = vmul.f32 %v2107, 0.70710677
    %v2125 = vmul.f32 %v2117, %v2117
    %v2126 = vmin.f32 16.0, %v2125
    %v2127 = vmul.f32 %v2126, 2.1237322e-06
    %v2128 = vadd.f32 %v2127, 0.00028619796
    %v2129 = vmul.f32 %v2126, %v2128
    %v2130 = vadd.f32 %v2129, 0.0036580483
    %v2131 = vmul.f32 %v2126, %v2130
    %v2132 = vadd.f32 %v2131, 0.05243302
    %v2133 = vmul.f32 %v2126, %v2132
    %v2134 = vadd.f32 %v2133, 0.18741608
    %v2135 = vmul.f32 %v2126, %v2134
    %v2136 = vadd.f32 %v2135, 1.1283791
    %v2137 = vmul.f32 %v2117, %v2136
    %v2138 = vmul.f32 %v2126, 3.8918573e-05
    %v2139 = vadd.f32 %v2138, 0.001143296
    %v2140 = vmul.f32 %v2126, %v2139
    %v2141 = vadd.f32 %v2140, 0.014752088
    %v2142 = vmul.f32 %v2126, %v2141
    %v2143 = vadd.f32 %v2142, 0.112945676
    %v2144 = vmul.f32 %v2126, %v2143
    %v2145 = vadd.f32 %v2144, 0.4994258
    %v2146 = vmul.f32 %v2126, %v2145
    %v2147 = vadd.f32 %v2146, 1.0
    %v2148 = vrcp.pop %v2147
    %v2149 = vmul.f32 %v2147, %v2148
    %v2150 = vsub.f32 1.0, %v2149
    %v2151 = vmul.f32 %v2148, %v2150
    %v2152 = vadd.f32 %v2148, %v2151
    %vm2153 = vweird.f32 %v2147
    %vm2154 = vweird.f32 %v2148
    %vm2155 = vmor %vm2153, %vm2154
    %v2156 = vsel %vm2155, %v2148, %v2152
    %v2157 = vand.u32 2147483647, %v2147
    %vm2158 = vcmp.eq.f32.partialorder %v2157, 8.507059e+37
    %v2159 = vand.u32 %v2147, 2147483648
    %v2160 = vor.u32 1.1754944e-38, %v2159
    %v2161 = vsel %vm2158, %v2160, %v2156
    %v2162 = vmul.f32 %v2137, %v2161
    %v2163 = vmin.f32 %v2162, 1.0
    %v2164 = vmax.f32 %v2163, -1.0
    %v2165 = vmul.f32 %v2118, %v2118
    %v2166 = vmin.f32 16.0, %v2165
    %v2167 = vmul.f32 %v2166, 2.1237322e-06
    %v2168 = vadd.f32 %v2167, 0.00028619796
    %v2169 = vmul.f32 %v2166, %v2168
    %v2170 = vadd.f32 %v2169, 0.0036580483
    %v2171 = vmul.f32 %v2166, %v2170
    %v2172 = vadd.f32 %v2171, 0.05243302
    %v2173 = vmul.f32 %v2166, %v2172
    %v2174 = vadd.f32 %v2173, 0.18741608
    %v2175 = vmul.f32 %v2166, %v2174
    %v2176 = vadd.f32 %v2175, 1.1283791
    %v2177 = vmul.f32 %v2118, %v2176
    %v2178 = vmul.f32 %v2166, 3.8918573e-05
    %v2179 = vadd.f32 %v2178, 0.001143296
    %v2180 = vmul.f32 %v2166, %v2179
    %v2181 = vadd.f32 %v2180, 0.014752088
    %v2182 = vmul.f32 %v2166, %v2181
    %v2183 = vadd.f32 %v2182, 0.112945676
    %v2184 = vmul.f32 %v2166, %v2183
    %v2185 = vadd.f32 %v2184, 0.4994258
    %v2186 = vmul.f32 %v2166, %v2185
    %v2187 = vadd.f32 %v2186, 1.0
    %v2188 = vrcp.pop %v2187
    %v2189 = vmul.f32 %v2187, %v2188
    %v2190 = vsub.f32 1.0, %v2189
    %v2191 = vmul.f32 %v2188, %v2190
    %v2192 = vadd.f32 %v2188, %v2191
    %vm2193 = vweird.f32 %v2187
    %vm2194 = vweird.f32 %v2188
    %vm2195 = vmor %vm2193, %vm2194
    %v2196 = vsel %vm2195, %v2188, %v2192
    %v2197 = vand.u32 2147483647, %v2187
    %vm2198 = vcmp.eq.f32.partialorder %v2197, 8.507059e+37
    %v2199 = vand.u32 %v2187, 2147483648
    %v2200 = vor.u32 1.1754944e-38, %v2199
    %v2201 = vsel %vm2198, %v2200, %v2196
    %v2202 = vmul.f32 %v2177, %v2201
    %v2203 = vmin.f32 %v2202, 1.0
    %v2204 = vmax.f32 %v2203, -1.0
    %v2205 = vmul.f32 %v2119, %v2119
    %v2206 = vmin.f32 16.0, %v2205
    %v2207 = vmul.f32 %v2206, 2.1237322e-06
    %v2208 = vadd.f32 %v2207, 0.00028619796
    %v2209 = vmul.f32 %v2206, %v2208
    %v2210 = vadd.f32 %v2209, 0.0036580483
    %v2211 = vmul.f32 %v2206, %v2210
    %v2212 = vadd.f32 %v2211, 0.05243302
    %v2213 = vmul.f32 %v2206, %v2212
    %v2214 = vadd.f32 %v2213, 0.18741608
    %v2215 = vmul.f32 %v2206, %v2214
    %v2216 = vadd.f32 %v2215, 1.1283791
    %v2217 = vmul.f32 %v2119, %v2216
    %v2218 = vmul.f32 %v2206, 3.8918573e-05
    %v2219 = vadd.f32 %v2218, 0.001143296
    %v2220 = vmul.f32 %v2206, %v2219
    %v2221 = vadd.f32 %v2220, 0.014752088
    %v2222 = vmul.f32 %v2206, %v2221
    %v2223 = vadd.f32 %v2222, 0.112945676
    %v2224 = vmul.f32 %v2206, %v2223
    %v2225 = vadd.f32 %v2224, 0.4994258
    %v2226 = vmul.f32 %v2206, %v2225
    %v2227 = vadd.f32 %v2226, 1.0
    %v2228 = vrcp.pop %v2227
    %v2229 = vmul.f32 %v2227, %v2228
    %v2230 = vsub.f32 1.0, %v2229
    %v2231 = vmul.f32 %v2228, %v2230
    %v2232 = vadd.f32 %v2228, %v2231
    %vm2233 = vweird.f32 %v2227
    %vm2234 = vweird.f32 %v2228
    %vm2235 = vmor %vm2233, %vm2234
    %v2236 = vsel %vm2235, %v2228, %v2232
    %v2237 = vand.u32 2147483647, %v2227
    %vm2238 = vcmp.eq.f32.partialorder %v2237, 8.507059e+37
    %v2239 = vand.u32 %v2227, 2147483648
    %v2240 = vor.u32 1.1754944e-38, %v2239
    %v2241 = vsel %vm2238, %v2240, %v2236
    %v2242 = vmul.f32 %v2217, %v2241
    %v2243 = vmin.f32 %v2242, 1.0
    %v2244 = vmax.f32 %v2243, -1.0
    %v2245 = vmul.f32 %v2120, %v2120
    %v2246 = vmin.f32 16.0, %v2245
    %v2247 = vmul.f32 %v2246, 2.1237322e-06
    %v2248 = vadd.f32 %v2247, 0.00028619796
    %v2249 = vmul.f32 %v2246, %v2248
    %v2250 = vadd.f32 %v2249, 0.0036580483
    %v2251 = vmul.f32 %v2246, %v2250
    %v2252 = vadd.f32 %v2251, 0.05243302
    %v2253 = vmul.f32 %v2246, %v2252
    %v2254 = vadd.f32 %v2253, 0.18741608
    %v2255 = vmul.f32 %v2246, %v2254
    %v2256 = vadd.f32 %v2255, 1.1283791
    %v2257 = vmul.f32 %v2120, %v2256
    %v2258 = vmul.f32 %v2246, 3.8918573e-05
    %v2259 = vadd.f32 %v2258, 0.001143296
    %v2260 = vmul.f32 %v2246, %v2259
    %v2261 = vadd.f32 %v2260, 0.014752088
    %v2262 = vmul.f32 %v2246, %v2261
    %v2263 = vadd.f32 %v2262, 0.112945676
    %v2264 = vmul.f32 %v2246, %v2263
    %v2265 = vadd.f32 %v2264, 0.4994258
    %v2266 = vmul.f32 %v2246, %v2265
    %v2267 = vadd.f32 %v2266, 1.0
    %v2268 = vrcp.pop %v2267
    %v2269 = vmul.f32 %v2267, %v2268
    %v2270 = vsub.f32 1.0, %v2269
    %v2271 = vmul.f32 %v2268, %v2270
    %v2272 = vadd.f32 %v2268, %v2271
    %vm2273 = vweird.f32 %v2267
    %vm2274 = vweird.f32 %v2268
    %vm2275 = vmor %vm2273, %vm2274
    %v2276 = vsel %vm2275, %v2268, %v2272
    %v2277 = vand.u32 2147483647, %v2267
    %vm2278 = vcmp.eq.f32.partialorder %v2277, 8.507059e+37
    %v2279 = vand.u32 %v2267, 2147483648
    %v2280 = vor.u32 1.1754944e-38, %v2279
    %v2281 = vsel %vm2278, %v2280, %v2276
    %v2282 = vmul.f32 %v2257, %v2281
    %v2283 = vmin.f32 %v2282, 1.0
    %v2284 = vmax.f32 %v2283, -1.0
    %v2285 = vmul.f32 %v2121, %v2121
    %v2286 = vmin.f32 16.0, %v2285
    %v2287 = vmul.f32 %v2286, 2.1237322e-06
    %v2288 = vadd.f32 %v2287, 0.00028619796
    %v2289 = vmul.f32 %v2286, %v2288
    %v2290 = vadd.f32 %v2289, 0.0036580483
    %v2291 = vmul.f32 %v2286, %v2290
    %v2292 = vadd.f32 %v2291, 0.05243302
    %v2293 = vmul.f32 %v2286, %v2292
    %v2294 = vadd.f32 %v2293, 0.18741608
    %v2295 = vmul.f32 %v2286, %v2294
    %v2296 = vadd.f32 %v2295, 1.1283791
    %v2297 = vmul.f32 %v2121, %v2296
    %v2298 = vmul.f32 %v2286, 3.8918573e-05
    %v2299 = vadd.f32 %v2298, 0.001143296
    %v2300 = vmul.f32 %v2286, %v2299
    %v2301 = vadd.f32 %v2300, 0.014752088
    %v2302 = vmul.f32 %v2286, %v2301
    %v2303 = vadd.f32 %v2302, 0.112945676
    %v2304 = vmul.f32 %v2286, %v2303
    %v2305 = vadd.f32 %v2304, 0.4994258
    %v2306 = vmul.f32 %v2286, %v2305
    %v2307 = vadd.f32 %v2306, 1.0
    %v2308 = vrcp.pop %v2307
    %v2309 = vmul.f32 %v2307, %v2308
    %v2310 = vsub.f32 1.0, %v2309
    %v2311 = vmul.f32 %v2308, %v2310
    %v2312 = vadd.f32 %v2308, %v2311
    %vm2313 = vweird.f32 %v2307
    %vm2314 = vweird.f32 %v2308
    %vm2315 = vmor %vm2313, %vm2314
    %v2316 = vsel %vm2315, %v2308, %v2312
    %v2317 = vand.u32 2147483647, %v2307
    %vm2318 = vcmp.eq.f32.partialorder %v2317, 8.507059e+37
    %v2319 = vand.u32 %v2307, 2147483648
    %v2320 = vor.u32 1.1754944e-38, %v2319
    %v2321 = vsel %vm2318, %v2320, %v2316
    %v2322 = vmul.f32 %v2297, %v2321
    %v2323 = vmin.f32 %v2322, 1.0
    %v2324 = vmax.f32 %v2323, -1.0
    %v2325 = vmul.f32 %v2122, %v2122
    %v2326 = vmin.f32 16.0, %v2325
    %v2327 = vmul.f32 %v2326, 2.1237322e-06
    %v2328 = vadd.f32 %v2327, 0.00028619796
    %v2329 = vmul.f32 %v2326, %v2328
    %v2330 = vadd.f32 %v2329, 0.0036580483
    %v2331 = vmul.f32 %v2326, %v2330
    %v2332 = vadd.f32 %v2331, 0.05243302
    %v2333 = vmul.f32 %v2326, %v2332
    %v2334 = vadd.f32 %v2333, 0.18741608
    %v2335 = vmul.f32 %v2326, %v2334
    %v2336 = vadd.f32 %v2335, 1.1283791
    %v2337 = vmul.f32 %v2122, %v2336
    %v2338 = vmul.f32 %v2326, 3.8918573e-05
    %v2339 = vadd.f32 %v2338, 0.001143296
    %v2340 = vmul.f32 %v2326, %v2339
    %v2341 = vadd.f32 %v2340, 0.014752088
    %v2342 = vmul.f32 %v2326, %v2341
    %v2343 = vadd.f32 %v2342, 0.112945676
    %v2344 = vmul.f32 %v2326, %v2343
    %v2345 = vadd.f32 %v2344, 0.4994258
    %v2346 = vmul.f32 %v2326, %v2345
    %v2347 = vadd.f32 %v2346, 1.0
    %v2348 = vrcp.pop %v2347
    %v2349 = vmul.f32 %v2347, %v2348
    %v2350 = vsub.f32 1.0, %v2349
    %v2351 = vmul.f32 %v2348, %v2350
    %v2352 = vadd.f32 %v2348, %v2351
    %vm2353 = vweird.f32 %v2347
    %vm2354 = vweird.f32 %v2348
    %vm2355 = vmor %vm2353, %vm2354
    %v2356 = vsel %vm2355, %v2348, %v2352
    %v2357 = vand.u32 2147483647, %v2347
    %vm2358 = vcmp.eq.f32.partialorder %v2357, 8.507059e+37
    %v2359 = vand.u32 %v2347, 2147483648
    %v2360 = vor.u32 1.1754944e-38, %v2359
    %v2361 = vsel %vm2358, %v2360, %v2356
    %v2362 = vmul.f32 %v2337, %v2361
    %v2363 = vmin.f32 %v2362, 1.0
    %v2364 = vmax.f32 %v2363, -1.0
    %v2365 = vmul.f32 %v2123, %v2123
    %v2366 = vmin.f32 16.0, %v2365
    %v2367 = vmul.f32 %v2366, 2.1237322e-06
    %v2368 = vadd.f32 %v2367, 0.00028619796
    %v2369 = vmul.f32 %v2366, %v2368
    %v2370 = vadd.f32 %v2369, 0.0036580483
    %v2371 = vmul.f32 %v2366, %v2370
    %v2372 = vadd.f32 %v2371, 0.05243302
    %v2373 = vmul.f32 %v2366, %v2372
    %v2374 = vadd.f32 %v2373, 0.18741608
    %v2375 = vmul.f32 %v2366, %v2374
    %v2376 = vadd.f32 %v2375, 1.1283791
    %v2377 = vmul.f32 %v2123, %v2376
    %v2378 = vmul.f32 %v2366, 3.8918573e-05
    %v2379 = vadd.f32 %v2378, 0.001143296
    %v2380 = vmul.f32 %v2366, %v2379
    %v2381 = vadd.f32 %v2380, 0.014752088
    %v2382 = vmul.f32 %v2366, %v2381
    %v2383 = vadd.f32 %v2382, 0.112945676
    %v2384 = vmul.f32 %v2366, %v2383
    %v2385 = vadd.f32 %v2384, 0.4994258
    %v2386 = vmul.f32 %v2366, %v2385
    %v2387 = vadd.f32 %v2386, 1.0
    %v2388 = vrcp.pop %v2387
    %v2389 = vmul.f32 %v2387, %v2388
    %v2390 = vsub.f32 1.0, %v2389
    %v2391 = vmul.f32 %v2388, %v2390
    %v2392 = vadd.f32 %v2388, %v2391
    %vm2393 = vweird.f32 %v2387
    %vm2394 = vweird.f32 %v2388
    %vm2395 = vmor %vm2393, %vm2394
    %v2396 = vsel %vm2395, %v2388, %v2392
    %v2397 = vand.u32 2147483647, %v2387
    %vm2398 = vcmp.eq.f32.partialorder %v2397, 8.507059e+37
    %v2399 = vand.u32 %v2387, 2147483648
    %v2400 = vor.u32 1.1754944e-38, %v2399
    %v2401 = vsel %vm2398, %v2400, %v2396
    %v2402 = vmul.f32 %v2377, %v2401
    %v2403 = vmin.f32 %v2402, 1.0
    %v2404 = vmax.f32 %v2403, -1.0
    %v2405 = vmul.f32 %v2124, %v2124
    %v2406 = vmin.f32 16.0, %v2405
    %v2407 = vmul.f32 %v2406, 2.1237322e-06
    %v2408 = vadd.f32 %v2407, 0.00028619796
    %v2409 = vmul.f32 %v2406, %v2408
    %v2410 = vadd.f32 %v2409, 0.0036580483
    %v2411 = vmul.f32 %v2406, %v2410
    %v2412 = vadd.f32 %v2411, 0.05243302
    %v2413 = vmul.f32 %v2406, %v2412
    %v2414 = vadd.f32 %v2413, 0.18741608
    %v2415 = vmul.f32 %v2406, %v2414
    %v2416 = vadd.f32 %v2415, 1.1283791
    %v2417 = vmul.f32 %v2124, %v2416
    %v2418 = vmul.f32 %v2406, 3.8918573e-05
    %v2419 = vadd.f32 %v2418, 0.001143296
    %v2420 = vmul.f32 %v2406, %v2419
    %v2421 = vadd.f32 %v2420, 0.014752088
    %v2422 = vmul.f32 %v2406, %v2421
    %v2423 = vadd.f32 %v2422, 0.112945676
    %v2424 = vmul.f32 %v2406, %v2423
    %v2425 = vadd.f32 %v2424, 0.4994258
    %v2426 = vmul.f32 %v2406, %v2425
    %v2427 = vadd.f32 %v2426, 1.0
    %v2428 = vrcp.pop %v2427
    %v2429 = vmul.f32 %v2427, %v2428
    %v2430 = vsub.f32 1.0, %v2429
    %v2431 = vmul.f32 %v2428, %v2430
    %v2432 = vadd.f32 %v2428, %v2431
    %vm2433 = vweird.f32 %v2427
    %vm2434 = vweird.f32 %v2428
    %vm2435 = vmor %vm2433, %vm2434
    %v2436 = vsel %vm2435, %v2428, %v2432
    %v2437 = vand.u32 2147483647, %v2427
    %vm2438 = vcmp.eq.f32.partialorder %v2437, 8.507059e+37
    %v2439 = vand.u32 %v2427, 2147483648
    %v2440 = vor.u32 1.1754944e-38, %v2439
    %v2441 = vsel %vm2438, %v2440, %v2436
    %v2442 = vmul.f32 %v2417, %v2441
    %v2443 = vmin.f32 %v2442, 1.0
    %v2444 = vmax.f32 %v2443, -1.0
    %v2445 = vadd.f32 %v2164, 1.0
    %v2446 = vadd.f32 %v2204, 1.0
    %v2447 = vadd.f32 %v2244, 1.0
    %v2448 = vadd.f32 %v2284, 1.0
    %v2449 = vadd.f32 %v2324, 1.0
    %v2450 = vadd.f32 %v2364, 1.0
    %v2451 = vadd.f32 %v2404, 1.0
    %v2452 = vadd.f32 %v2444, 1.0
    %v2453 = vmul.f32 %v2109, %v2445
    %v2454 = vmul.f32 %v2110, %v2446
    %v2455 = vmul.f32 %v2111, %v2447
    %v2456 = vmul.f32 %v2112, %v2448
    %v2457 = vmul.f32 %v2113, %v2449
    %v2458 = vmul.f32 %v2114, %v2450
    %v2459 = vmul.f32 %v2115, %v2451
    %v2460 = vmul.f32 %v2116, %v2452
    %v2461 = vld [vmem:[%s3] sm:$0xf]
    %v2463 = vperm.slane %v2461, 0
    %v2464 = vperm.slane %v2461, 1
    %v2465 = vperm.slane %v2461, 2
    %v2466 = vperm.slane %v2461, 3
    %v2471 = vmul.f32 %v2453, %v2463
    %v2472 = vmul.f32 %v2454, %v2464
    %v2473 = vmul.f32 %v2455, %v2465
    %v2474 = vmul.f32 %v2456, %v2466
    %v2475 = vmul.f32 %v2457, %v2463
    %v2476 = vmul.f32 %v2458, %v2464
    %v2477 = vmul.f32 %v2459, %v2465
    %v2478 = vmul.f32 %v2460, %v2466
    %v2479 = vadd.f32 %v2471, %v2472
    %v2480 = vadd.f32 %v2479, %v2473
    %v2481 = vadd.f32 %v2480, %v2474
    %2482 = vadd.xlane.f32.xlu0 %v2481
    %v2483 = vpop.xlane.xlu0 %2482
    %v2484 = vadd.f32 %v2475, %v2476
    %v2485 = vadd.f32 %v2484, %v2477
    %v2486 = vadd.f32 %v2485, %v2478
    %2487 = vadd.xlane.f32.xlu0 %v2486
    %v2488 = vpop.xlane.xlu0 %2487
    %s2489 = sld [smem:[#allocation2]]
    %v2490 = vstv %s2489
    %v2491 = vadd.f32 %v2483, %v2490
    %v2492 = vadd.f32 %v2488, %v2490
    %v2495 = vlaneseq
    %v2496 = vand.u32 %v2495, 127
    %v2497 = vperm.slane %v2491, %v2496
    %v2498 = vadd.s32 %v2496, 4294967288
    %v2499 = vperm.slane %v2492, %v2498
    %vm2500 = vcmask 130112
    %v2501 = vsel %vm2500, %v2499, %v2497
    %vm2503 = vcmask 122880
    %2504 = vst.msk [vmem:[#allocation9] sm:$0x1] %vm2503, %v2501
    // Predicated region
    $region34: #{tpu_custom_call.1} parent=1 // pred_check
      _
    $region35: #{tpu_custom_call.1} parent=1 // pred_check_branch
      %2506 = sbr.rel (0) target = $region37
    $region36: #{tpu_custom_call.1} parent=1 // pred_region
      %2508 = vsyncadd [#allocation5], 0
      %s2510 = sshll.u32 [#allocation9], 4
      %s2511 = int_to_ptr.vmem [resolvable:$true] %s2510
      %s2512 = sshll.u32 %s5, 4
      %s2513 = int_to_ptr.hbm [resolvable:$true] %s2512
      %2515 = dma.vmem_to_hbm [thread:$0]  %s2511, 16, %s2513, [#allocation5]
    $region37: #{tpu_custom_call.1} parent=1 // pred_fallthru
      _
    // Predicated region
    $region38: #{tpu_custom_call.1} parent=1 // pred_check
      _
    $region39: #{tpu_custom_call.1} parent=1 // pred_check_branch
      %2517 = sbr.rel (0) target = $region41
    $region40: #{tpu_custom_call.1} parent=1 // pred_region
      %2519 = dma.done [#allocation5], 16
    $region41: #{tpu_custom_call.1} parent=1 // pred_fallthru
      _
    %2520 = vsyncpa [#allocation4], 1
    %2521 = vsyncpa [#allocation7], 1
    %2522 = vsyncpa [#allocation5], 1

</llo_original>
